<compile_context>
chip_gen: v7x
topology: tpu7x:2x2x1
jax: 0.10.0
libtpu: 0.0.40
codegen_flags: <defaults>
</compile_context>

<pallas_src>
import functools

import jax
import jax.numpy as jnp
from jax.experimental import pallas as pl
from jax.experimental.pallas import tpu as pltpu


def _round_up(x, m):
    return (x + m - 1) // m * m


def _cdiv(a, b):
    return -(-a // b)


def _pad2d(a, shape):
    """Zero-pad a 2D array to `shape`; no-op (no HBM pass) if already aligned."""
    if tuple(a.shape) == tuple(shape):
        return a
    return jnp.pad(a, [(0, t - s) for s, t in zip(a.shape, shape)])


def _device_kind():
    try:
        return jax.devices()[0].device_kind.lower()
    except Exception:
        return ""


def _physical_vmem_bytes():
    try:
        return int(pltpu.get_tpu_info().vmem_capacity_bytes)
    except Exception:
        # Fallback: v7x has 64 MiB per TensorCore; v5e/v6e have 128 MiB.
        return (64 << 20) if ("7" in _device_kind()) else (128 << 20)


def _default_act_dtype():
    # bf16 VPU/EUP exists on v6e and v7x; keep activations f32 elsewhere (v5e).
    kind = _device_kind()
    if ("v6" in kind) or ("v7" in kind) or ("7x" in kind):
        return jnp.bfloat16
    return jnp.float32


def _mlp_kernel(x_ref, w1_ref, b1_ref, w2_ref, b2_ref, w3_ref, b3_ref, o_ref,
                *, compute_dtype, act_dtype):
    # x cast to the MXU compute dtype is fused into the kernel (x is DMA'd in
    # its original dtype; no separate wrapper-side cast pass over HBM).
    h = x_ref[...].astype(compute_dtype)

    # Layers 1 & 2: bf16 MXU matmul with f32 accumulation, bias add in f32,
    # tanh in act_dtype (bf16 on v6e/v7x, f32 on v5e), bf16 carried to next dot.
    h = jnp.dot(h, w1_ref[...], preferred_element_type=jnp.float32)
    h = jnp.tanh((h + b1_ref[...]).astype(act_dtype)).astype(compute_dtype)

    h = jnp.dot(h, w2_ref[...], preferred_element_type=jnp.float32)
    h = jnp.tanh((h + b2_ref[...]).astype(act_dtype)).astype(compute_dtype)

    # Layer 3: final bias+tanh in f32 (output is stored in o_ref.dtype anyway;
    # the output layer is the narrowest so the EUP cost difference is trivial).
    h = jnp.dot(h, w3_ref[...], preferred_element_type=jnp.float32)
    o_ref[...] = jnp.tanh(h + b3_ref[...]).astype(o_ref.dtype)


def network_forward(x, params, *, tb=None, compute_dtype=jnp.bfloat16,
                    act_dtype=None):
    """Fused MLP forward. x: (B, in_dim) -> (B, out_dim), same dtype as x."""
    w1, b1, w2, b2, w3, b3 = params
    B, in_dim = x.shape
    h1, h2, out_dim = w1.shape[1], w2.shape[1], w3.shape[1]
    out_dtype = x.dtype

    if compute_dtype == jnp.float32:
        act_dtype = jnp.float32           # strict-parity path
    elif act_dtype is None:
        act_dtype = _default_act_dtype()

    # Lane-pad feature dims to multiples of 128 (full MXU lanes, unmasked vst).
    in_p, h1_p, h2_p, out_p = (_round_up(d, 128) for d in (in_dim, h1, h2, out_dim))

    cbytes = jnp.dtype(compute_dtype).itemsize
    xbytes = x.dtype.itemsize
    obytes = jnp.dtype(out_dtype).itemsize

    # Resident weights + biases (single-buffered: constant across the grid).
    weight_elem = in_p * h1_p + h1_p * h2_p + h2_p * out_p
    bias_elem = h1_p + h2_p + out_p
    weight_bytes = weight_elem * cbytes + 8 * bias_elem * 4   # biases sublane-padded f32

    phys_vmem = _physical_vmem_bytes()
    usable_vmem = int(phys_vmem * 0.85)   # headroom for compiler-internal scratch

    # Batch tile: MXU-aligned (multiple of 128), capped at 512 for VMEM.
    if tb is None:
        tb = min(512, max(128, _round_up(_cdiv(_round_up(B, 128), 2), 128)))
    else:
        tb = max(128, _round_up(int(tb), 128))

    def _footprint(tb_):
        tile_bytes = 2 * tb_ * (in_p * xbytes + out_p * obytes)   # double-buffered x/out
        scratch_bytes = tb_ * bias_elem * 4                        # f32 layer outputs
        scratch_bytes += tb_ * (in_p + h1_p + h2_p) * cbytes       # bf16 matmul operands
        return weight_bytes + tile_bytes + scratch_bytes

    while _footprint(tb) > usable_vmem and tb > 128:
        tb = max(128, _round_up(tb // 2, 128))

    vmem_needed = _footprint(tb)
    if vmem_needed > usable_vmem:
        # TODO(synk): N/K-tiled fallback for layer widths whose resident weights
        # exceed VMEM; not needed for this module's sizes.
        raise ValueError(
            f"fused MLP kernel needs ~{vmem_needed >> 20} MiB VMEM but only "
            f"~{usable_vmem >> 20} MiB is usable on this chip (layers too wide "
            "for the resident-weight design).")

    # >= 2 grid steps so the 'parallel' batch axis can use both v7x TensorCores.
    num_tiles = max(_cdiv(B, tb), 2)
    B_p = num_tiles * tb
    grid = (num_tiles,)

    # Pads are no-ops when shapes are already aligned; x is NOT cast here.
    xp = _pad2d(x, (B_p, in_p))
    w1p = _pad2d(w1, (in_p, h1_p)).astype(compute_dtype)
    w2p = _pad2d(w2, (h1_p, h2_p)).astype(compute_dtype)
    w3p = _pad2d(w3, (h2_p, out_p)).astype(compute_dtype)
    b1p = _pad2d(b1.reshape(1, -1), (1, h1_p)).astype(jnp.float32)
    b2p = _pad2d(b2.reshape(1, -1), (1, h2_p)).astype(jnp.float32)
    b3p = _pad2d(b3.reshape(1, -1), (1, out_p)).astype(jnp.float32)

    vmem_limit = int(min(max(2 * vmem_needed, 16 << 20), usable_vmem))

    cost = pl.CostEstimate(
        flops=int(2 * B_p * weight_elem),
        transcendentals=int(B_p * bias_elem),
        bytes_accessed=int(B_p * in_p * xbytes + weight_elem * cbytes
                           + bias_elem * 4 + B_p * out_p * obytes),
    )

    kernel = functools.partial(_mlp_kernel, compute_dtype=compute_dtype,
                               act_dtype=act_dtype)
    row_map = lambda i: (i, 0)

    def build_call(weight_spec):
        return pl.pallas_call(
            kernel,
            out_shape=jax.ShapeDtypeStruct((B_p, out_p), out_dtype),
            grid_spec=pltpu.PrefetchScalarGridSpec(
                num_scalar_prefetch=0,
                grid=grid,
                in_specs=[
                    pl.BlockSpec((tb, in_p), row_map),   # x, tiled over batch
                    weight_spec(w1p.shape),              # w1 (VMEM-resident)
                    weight_spec(b1p.shape),              # b1
                    weight_spec(w2p.shape),              # w2
                    weight_spec(b2p.shape),              # b2
                    weight_spec(w3p.shape),              # w3
                    weight_spec(b3p.shape),              # b3
                ],
                out_specs=pl.BlockSpec((tb, out_p), row_map),
            ),
            compiler_params=pltpu.CompilerParams(
                dimension_semantics=("parallel",),
                vmem_limit_bytes=vmem_limit,
            ),
            cost_estimate=cost,
        )

    args = (xp, w1p, b1p, w2p, b2p, w3p, b3p)
    try:
        # Primary: whole weight/bias arrays pinned in VMEM (single buffer; no
        # double-buffering of blocks whose index never changes).
        out_padded = build_call(
            lambda shape: pl.BlockSpec(memory_space=pltpu.MemorySpace.VMEM))(*args)
    except Exception:
        # Fallback: full-shape block with constant index map (double-buffered
        # allocation but never re-fetched) - known-good on all generations.
        out_padded = build_call(
            lambda shape: pl.BlockSpec(shape, lambda i: (0, 0)))(*args)

    if B_p == B and out_p == out_dim:
        return out_padded
    return out_padded[:B, :out_dim]


def init_params(key, in_dim, h1, h2, out_dim, dtype=jnp.float32):
    """Deterministic init mimicking nn.Linear's U(-1/sqrt(fan_in), 1/sqrt(fan_in))."""
    ks = jax.random.split(key, 6)

    def linear(kw, kb, fan_in, fan_out):
        bound = 1.0 / jnp.sqrt(float(fan_in))
        w = jax.random.uniform(kw, (fan_in, fan_out), dtype, -bound, bound)
        b = jax.random.uniform(kb, (1, fan_out), dtype, -bound, bound)
        return w, b

    w1, b1 = linear(ks[0], ks[1], in_dim, h1)
    w2, b2 = linear(ks[2], ks[3], h1, h2)
    w3, b3 = linear(ks[4], ks[5], h2, out_dim)
    return (w1, b1, w2, b2, w3, b3)


def network_ref(x, params):
    """Pure-JAX f32 reference of the PyTorch forward."""
    w1, b1, w2, b2, w3, b3 = params
    h = jnp.tanh(x @ w1 + b1)
    h = jnp.tanh(h @ w2 + b2)
    return jnp.tanh(h @ w3 + b3)


if __name__ == "__main__":
    key = jax.random.PRNGKey(0)
    in_dim, h1, h2, out_dim = 32, 64, 48, 16
    batch = 8

    kx, kp = jax.random.split(key)
    x = jax.random.normal(kx, (batch, in_dim), jnp.float32)
    params = init_params(kp, in_dim, h1, h2, out_dim)

    out = network_forward(x, params)
    out = jax.block_until_ready(out)

    ref = network_ref(x, params)
    assert out.shape == (batch, out_dim)
    assert out.dtype == x.dtype
    # bf16 matmuls (+ bf16 tanh on v6e/v7x) with f32 accumulation vs f32 ref.
    assert jnp.allclose(out, ref, atol=2.5e-2, rtol=2.5e-2), "mismatch vs reference"

    print("KERNEL_OK")
</pallas_src>

<mosaic_0001>
module attributes {stable_mosaic.version = 11 : i64} {
  func.func @_mlp_kernel(%arg0: i32, %arg1: memref<128x128xf32, #tpu.memory_space<vmem>>, %arg2: memref<128x128xbf16, #tpu.memory_space<vmem>>, %arg3: memref<1x128xf32, #tpu.memory_space<vmem>>, %arg4: memref<128x128xbf16, #tpu.memory_space<vmem>>, %arg5: memref<1x128xf32, #tpu.memory_space<vmem>>, %arg6: memref<128x128xbf16, #tpu.memory_space<vmem>>, %arg7: memref<1x128xf32, #tpu.memory_space<vmem>>, %arg8: memref<128x128xf32, #tpu.memory_space<vmem>>) attributes {dimension_semantics = [#tpu.dimension_semantics<parallel>], iteration_bounds = array<i64: 2>, scalar_prefetch = 0 : i64, scratch_operands = 0 : i64, tpu.core_type = #tpu.core_type<tc>, window_params = [{transform_indices = @transform_0, window_bounds = array<i64: 128, 128>}, {pipeline_mode = #tpu.pipeline_mode<synchronous>, transform_indices = @transform_1, window_bounds = array<i64: 128, 128>}, {pipeline_mode = #tpu.pipeline_mode<synchronous>, transform_indices = @transform_2, window_bounds = array<i64: 1, 128>}, {pipeline_mode = #tpu.pipeline_mode<synchronous>, transform_indices = @transform_3, window_bounds = array<i64: 128, 128>}, {pipeline_mode = #tpu.pipeline_mode<synchronous>, transform_indices = @transform_4, window_bounds = array<i64: 1, 128>}, {pipeline_mode = #tpu.pipeline_mode<synchronous>, transform_indices = @transform_5, window_bounds = array<i64: 128, 128>}, {pipeline_mode = #tpu.pipeline_mode<synchronous>, transform_indices = @transform_6, window_bounds = array<i64: 1, 128>}, {transform_indices = @transform_7, window_bounds = array<i64: 128, 128>}]} {
    %c0 = arith.constant 0 : index
    %c0_0 = arith.constant 0 : index
    %0 = vector.load %arg1[%c0, %c0_0] : memref<128x128xf32, #tpu.memory_space<vmem>>, vector<128x128xf32>
    %1 = arith.truncf %0 : vector<128x128xf32> to vector<128x128xbf16>
    %c0_1 = arith.constant 0 : index
    %c0_2 = arith.constant 0 : index
    %2 = vector.load %arg2[%c0_1, %c0_2] : memref<128x128xbf16, #tpu.memory_space<vmem>>, vector<128x128xbf16>
    %cst = arith.constant dense<0.000000e+00> : vector<128x128xf32>
    %3 = tpu.matmul %1, %2, %cst {dimension_numbers = #tpu.dot_dimension_numbers<[1], [0], [0], [1], [0, 0, 1, 1], [], []>} : vector<128x128xbf16>, vector<128x128xbf16>, vector<128x128xf32> -> vector<128x128xf32>
    %c0_3 = arith.constant 0 : index
    %c0_4 = arith.constant 0 : index
    %4 = vector.load %arg3[%c0_3, %c0_4] : memref<1x128xf32, #tpu.memory_space<vmem>>, vector<1x128xf32>
    %5 = vector.broadcast %4 : vector<1x128xf32> to vector<128x128xf32>
    %6 = arith.addf %3, %5 : vector<128x128xf32>
    %7 = math.tanh %6 : vector<128x128xf32>
    %8 = arith.truncf %7 : vector<128x128xf32> to vector<128x128xbf16>
    %c0_5 = arith.constant 0 : index
    %c0_6 = arith.constant 0 : index
    %9 = vector.load %arg4[%c0_5, %c0_6] : memref<128x128xbf16, #tpu.memory_space<vmem>>, vector<128x128xbf16>
    %cst_7 = arith.constant dense<0.000000e+00> : vector<128x128xf32>
    %10 = tpu.matmul %8, %9, %cst_7 {dimension_numbers = #tpu.dot_dimension_numbers<[1], [0], [0], [1], [0, 0, 1, 1], [], []>} : vector<128x128xbf16>, vector<128x128xbf16>, vector<128x128xf32> -> vector<128x128xf32>
    %c0_8 = arith.constant 0 : index
    %c0_9 = arith.constant 0 : index
    %11 = vector.load %arg5[%c0_8, %c0_9] : memref<1x128xf32, #tpu.memory_space<vmem>>, vector<1x128xf32>
    %12 = vector.broadcast %11 : vector<1x128xf32> to vector<128x128xf32>
    %13 = arith.addf %10, %12 : vector<128x128xf32>
    %14 = math.tanh %13 : vector<128x128xf32>
    %15 = arith.truncf %14 : vector<128x128xf32> to vector<128x128xbf16>
    %c0_10 = arith.constant 0 : index
    %c0_11 = arith.constant 0 : index
    %16 = vector.load %arg6[%c0_10, %c0_11] : memref<128x128xbf16, #tpu.memory_space<vmem>>, vector<128x128xbf16>
    %cst_12 = arith.constant dense<0.000000e+00> : vector<128x128xf32>
    %17 = tpu.matmul %15, %16, %cst_12 {dimension_numbers = #tpu.dot_dimension_numbers<[1], [0], [0], [1], [0, 0, 1, 1], [], []>} : vector<128x128xbf16>, vector<128x128xbf16>, vector<128x128xf32> -> vector<128x128xf32>
    %c0_13 = arith.constant 0 : index
    %c0_14 = arith.constant 0 : index
    %18 = vector.load %arg7[%c0_13, %c0_14] : memref<1x128xf32, #tpu.memory_space<vmem>>, vector<1x128xf32>
    %19 = vector.broadcast %18 : vector<1x128xf32> to vector<128x128xf32>
    %20 = arith.addf %17, %19 : vector<128x128xf32>
    %21 = math.tanh %20 : vector<128x128xf32>
    %c0_15 = arith.constant 0 : index
    %c0_16 = arith.constant 0 : index
    %22 = vector.load %arg8[%c0_15, %c0_16] : memref<128x128xf32, #tpu.memory_space<vmem>>, vector<128x128xf32>
    tpu.vector_store %arg8[%c0_15, %c0_16], %21 {strides = array<i32>} : memref<128x128xf32, #tpu.memory_space<vmem>>, vector<128x128xf32>,
    return
  }
  func.func @transform_0(%arg0: i32) -> (i32, i32) {
    %c0_i32 = arith.constant 0 : i32
    %c0_i32_0 = arith.constant 0 : i32
    return %arg0, %c0_i32 : i32, i32
  }
  func.func @transform_1(%arg0: i32) -> (i32, i32) {
    %c0_i32 = arith.constant 0 : i32
    %c0_i32_0 = arith.constant 0 : i32
    %c0_i32_1 = arith.constant 0 : i32
    return %c0_i32, %c0_i32_0 : i32, i32
  }
  func.func @transform_2(%arg0: i32) -> (i32, i32) {
    %c0_i32 = arith.constant 0 : i32
    %c0_i32_0 = arith.constant 0 : i32
    %c0_i32_1 = arith.constant 0 : i32
    return %c0_i32, %c0_i32_0 : i32, i32
  }
  func.func @transform_3(%arg0: i32) -> (i32, i32) {
    %c0_i32 = arith.constant 0 : i32
    %c0_i32_0 = arith.constant 0 : i32
    %c0_i32_1 = arith.constant 0 : i32
    return %c0_i32, %c0_i32_0 : i32, i32
  }
  func.func @transform_4(%arg0: i32) -> (i32, i32) {
    %c0_i32 = arith.constant 0 : i32
    %c0_i32_0 = arith.constant 0 : i32
    %c0_i32_1 = arith.constant 0 : i32
    return %c0_i32, %c0_i32_0 : i32, i32
  }
  func.func @transform_5(%arg0: i32) -> (i32, i32) {
    %c0_i32 = arith.constant 0 : i32
    %c0_i32_0 = arith.constant 0 : i32
    %c0_i32_1 = arith.constant 0 : i32
    return %c0_i32, %c0_i32_0 : i32, i32
  }
  func.func @transform_6(%arg0: i32) -> (i32, i32) {
    %c0_i32 = arith.constant 0 : i32
    %c0_i32_0 = arith.constant 0 : i32
    %c0_i32_1 = arith.constant 0 : i32
    return %c0_i32, %c0_i32_0 : i32, i32
  }
  func.func @transform_7(%arg0: i32) -> (i32, i32) {
    %c0_i32 = arith.constant 0 : i32
    %c0_i32_0 = arith.constant 0 : i32
    return %arg0, %c0_i32 : i32, i32
  }
}

module attributes {stable_mosaic.version = 11 : i64} {
  func.func @_mlp_kernel(%arg0: i32, %arg1: memref<128x128xf32, #tpu.memory_space<vmem>>, %arg2: memref<128x128xbf16, #tpu.memory_space<vmem>>, %arg3: memref<1x128xf32, #tpu.memory_space<vmem>>, %arg4: memref<128x128xbf16, #tpu.memory_space<vmem>>, %arg5: memref<1x128xf32, #tpu.memory_space<vmem>>, %arg6: memref<128x128xbf16, #tpu.memory_space<vmem>>, %arg7: memref<1x128xf32, #tpu.memory_space<vmem>>, %arg8: memref<128x128xf32, #tpu.memory_space<vmem>>) attributes {dimension_semantics = [#tpu.dimension_semantics<parallel>], iteration_bounds = array<i64: 2>, scalar_prefetch = 0 : i64, scratch_operands = 0 : i64, tpu.core_type = #tpu.core_type<tc>, window_params = [{transform_indices = @transform_0, window_bounds = array<i64: 128, 128>}, {pipeline_mode = #tpu.pipeline_mode<synchronous>, transform_indices = @transform_1, window_bounds = array<i64: 128, 128>}, {pipeline_mode = #tpu.pipeline_mode<synchronous>, transform_indices = @transform_2, window_bounds = array<i64: 1, 128>}, {pipeline_mode = #tpu.pipeline_mode<synchronous>, transform_indices = @transform_3, window_bounds = array<i64: 128, 128>}, {pipeline_mode = #tpu.pipeline_mode<synchronous>, transform_indices = @transform_4, window_bounds = array<i64: 1, 128>}, {pipeline_mode = #tpu.pipeline_mode<synchronous>, transform_indices = @transform_5, window_bounds = array<i64: 128, 128>}, {pipeline_mode = #tpu.pipeline_mode<synchronous>, transform_indices = @transform_6, window_bounds = array<i64: 1, 128>}, {transform_indices = @transform_7, window_bounds = array<i64: 128, 128>}]} {
    %c0 = arith.constant 0 : index
    %c0_0 = arith.constant 0 : index
    %0 = vector.load %arg1[%c0, %c0_0] : memref<128x128xf32, #tpu.memory_space<vmem>>, vector<128x128xf32>
    %1 = arith.truncf %0 : vector<128x128xf32> to vector<128x128xbf16>
    %c0_1 = arith.constant 0 : index
    %c0_2 = arith.constant 0 : index
    %2 = vector.load %arg2[%c0_1, %c0_2] : memref<128x128xbf16, #tpu.memory_space<vmem>>, vector<128x128xbf16>
    %cst = arith.constant dense<0.000000e+00> : vector<128x128xf32>
    %3 = tpu.matmul %1, %2, %cst {dimension_numbers = #tpu.dot_dimension_numbers<[1], [0], [0], [1], [0, 0, 1, 1], [], []>} : vector<128x128xbf16>, vector<128x128xbf16>, vector<128x128xf32> -> vector<128x128xf32>
    %c0_3 = arith.constant 0 : index
    %c0_4 = arith.constant 0 : index
    %4 = vector.load %arg3[%c0_3, %c0_4] : memref<1x128xf32, #tpu.memory_space<vmem>>, vector<1x128xf32>
    %5 = vector.broadcast %4 : vector<1x128xf32> to vector<128x128xf32>
    %6 = arith.addf %3, %5 : vector<128x128xf32>
    %7 = math.tanh %6 : vector<128x128xf32>
    %8 = arith.truncf %7 : vector<128x128xf32> to vector<128x128xbf16>
    %c0_5 = arith.constant 0 : index
    %c0_6 = arith.constant 0 : index
    %9 = vector.load %arg4[%c0_5, %c0_6] : memref<128x128xbf16, #tpu.memory_space<vmem>>, vector<128x128xbf16>
    %cst_7 = arith.constant dense<0.000000e+00> : vector<128x128xf32>
    %10 = tpu.matmul %8, %9, %cst_7 {dimension_numbers = #tpu.dot_dimension_numbers<[1], [0], [0], [1], [0, 0, 1, 1], [], []>} : vector<128x128xbf16>, vector<128x128xbf16>, vector<128x128xf32> -> vector<128x128xf32>
    %c0_8 = arith.constant 0 : index
    %c0_9 = arith.constant 0 : index
    %11 = vector.load %arg5[%c0_8, %c0_9] : memref<1x128xf32, #tpu.memory_space<vmem>>, vector<1x128xf32>
    %12 = vector.broadcast %11 : vector<1x128xf32> to vector<128x128xf32>
    %13 = arith.addf %10, %12 : vector<128x128xf32>
    %14 = math.tanh %13 : vector<128x128xf32>
    %15 = arith.truncf %14 : vector<128x128xf32> to vector<128x128xbf16>
    %c0_10 = arith.constant 0 : index
    %c0_11 = arith.constant 0 : index
    %16 = vector.load %arg6[%c0_10, %c0_11] : memref<128x128xbf16, #tpu.memory_space<vmem>>, vector<128x128xbf16>
    %cst_12 = arith.constant dense<0.000000e+00> : vector<128x128xf32>
    %17 = tpu.matmul %15, %16, %cst_12 {dimension_numbers = #tpu.dot_dimension_numbers<[1], [0], [0], [1], [0, 0, 1, 1], [], []>} : vector<128x128xbf16>, vector<128x128xbf16>, vector<128x128xf32> -> vector<128x128xf32>
    %c0_13 = arith.constant 0 : index
    %c0_14 = arith.constant 0 : index
    %18 = vector.load %arg7[%c0_13, %c0_14] : memref<1x128xf32, #tpu.memory_space<vmem>>, vector<1x128xf32>
    %19 = vector.broadcast %18 : vector<1x128xf32> to vector<128x128xf32>
    %20 = arith.addf %17, %19 : vector<128x128xf32>
    %21 = math.tanh %20 : vector<128x128xf32>
    %c0_15 = arith.constant 0 : index
    %c0_16 = arith.constant 0 : index
    %22 = vector.load %arg8[%c0_15, %c0_16] : memref<128x128xf32, #tpu.memory_space<vmem>>, vector<128x128xf32>
    tpu.vector_store %arg8[%c0_15, %c0_16], %21 {strides = array<i32>} : memref<128x128xf32, #tpu.memory_space<vmem>>, vector<128x128xf32>,
    return
  }
  func.func @transform_0(%arg0: i32) -> (i32, i32) {
    %c0_i32 = arith.constant 0 : i32
    %c0_i32_0 = arith.constant 0 : i32
    return %arg0, %c0_i32 : i32, i32
  }
  func.func @transform_1(%arg0: i32) -> (i32, i32) {
    %c0_i32 = arith.constant 0 : i32
    %c0_i32_0 = arith.constant 0 : i32
    %c0_i32_1 = arith.constant 0 : i32
    return %c0_i32, %c0_i32_0 : i32, i32
  }
  func.func @transform_2(%arg0: i32) -> (i32, i32) {
    %c0_i32 = arith.constant 0 : i32
    %c0_i32_0 = arith.constant 0 : i32
    %c0_i32_1 = arith.constant 0 : i32
    return %c0_i32, %c0_i32_0 : i32, i32
  }
  func.func @transform_3(%arg0: i32) -> (i32, i32) {
    %c0_i32 = arith.constant 0 : i32
    %c0_i32_0 = arith.constant 0 : i32
    %c0_i32_1 = arith.constant 0 : i32
    return %c0_i32, %c0_i32_0 : i32, i32
  }
  func.func @transform_4(%arg0: i32) -> (i32, i32) {
    %c0_i32 = arith.constant 0 : i32
    %c0_i32_0 = arith.constant 0 : i32
    %c0_i32_1 = arith.constant 0 : i32
    return %c0_i32, %c0_i32_0 : i32, i32
  }
  func.func @transform_5(%arg0: i32) -> (i32, i32) {
    %c0_i32 = arith.constant 0 : i32
    %c0_i32_0 = arith.constant 0 : i32
    %c0_i32_1 = arith.constant 0 : i32
    return %c0_i32, %c0_i32_0 : i32, i32
  }
  func.func @transform_6(%arg0: i32) -> (i32, i32) {
    %c0_i32 = arith.constant 0 : i32
    %c0_i32_0 = arith.constant 0 : i32
    %c0_i32_1 = arith.constant 0 : i32
    return %c0_i32, %c0_i32_0 : i32, i32
  }
  func.func @transform_7(%arg0: i32) -> (i32, i32) {
    %c0_i32 = arith.constant 0 : i32
    %c0_i32_0 = arith.constant 0 : i32
    return %arg0, %c0_i32 : i32, i32
  }
}

</mosaic_0001>

<llo_original>
// kernel: tpu_custom_call.1
$region0: #{tpu_custom_call.1}
  #allocation0 [shape = 'u32[]', space=smem, size = 0x4, offset = 0x4, fixed_abs, tag = 'smem constant byte address 0x4 - core index']
  #allocation1 [shape = 'u32[144,128]{1,0:T(1,128)}', space=vmem, size = 0x12000, scoped, tag = 'internal scratch']
  %s0 = inlined_call_operand.hbm [shape: f32[256,128], index: 0, kind: input, shape index: {}]
  %s1 = inlined_call_operand.hbm [shape: bf16[128,128], index: 1, kind: input, shape index: {}]
  %s2 = inlined_call_operand.vmem [shape: f32[1,128], index: 2, kind: input, shape index: {}]
  %s3 = inlined_call_operand.hbm [shape: bf16[128,128], index: 3, kind: input, shape index: {}]
  %s4 = inlined_call_operand.vmem [shape: f32[1,128], index: 4, kind: input, shape index: {}]
  %s5 = inlined_call_operand.hbm [shape: bf16[128,128], index: 5, kind: input, shape index: {}]
  %s6 = inlined_call_operand.vmem [shape: f32[1,128], index: 6, kind: input, shape index: {}]
  %s7 = inlined_call_operand.hbm [shape: f32[256,128], index: 7, kind: output, shape index: {}]
  %s8 = sld [smem:[#allocation0]]
  $region77: #{tpu_custom_call.1} parent=0
    _
  %s10 = ssub.s32 1, %s8
  %s11 = scalar_select 0, %s10, %s8
  $region1: #{tpu_custom_call.1} parent=0
    #allocation2 [shape = 'u8[131072]{0}', space=vmem, size = 0x20000, scoped, tag = 'input window, operand 0']
    #allocation3 [shape = 's32[2]{0}', space=sflag, size = 0x8, scoped, tag = 'scoped memory for tpu_custom_call.1']
    #allocation4 [shape = 's32[2]{0}', space=sflag, size = 0x8, scoped, tag = 'scoped memory for tpu_custom_call.1']
    #allocation5 [shape = 'u8[32768]{0}', space=vmem, size = 0x8000, scoped, tag = 'input window, operand 1, single buffered']
    #allocation6 [shape = 's32[1]{0}', space=sflag, size = 0x4, scoped, tag = 'scoped memory for tpu_custom_call.1']
    #allocation7 [shape = 'u8[32768]{0}', space=vmem, size = 0x8000, scoped, tag = 'input window, operand 3, single buffered']
    #allocation8 [shape = 'u8[32768]{0}', space=vmem, size = 0x8000, scoped, tag = 'input window, operand 5, single buffered']
    #allocation9 [shape = 's32[1]{0}', space=sflag, size = 0x4, scoped, tag = 'scoped memory for tpu_custom_call.1']
    #allocation10 [shape = 'u8[131072]{0}', space=vmem, size = 0x20000, scoped, tag = 'output window, operand 0']
    %12 = vsyncpa [#allocation3], 0
    %s13 = scalar_lea.sflag [#allocation3], 1
    %14 = vsyncpa %s13, 0
    %15 = vsyncpa [#allocation6], 0
    %16 = vsyncpa [#allocation9], 0
    %17 = vsyncpa [#allocation4], 0
    %s18 = scalar_lea.sflag [#allocation4], 1
    %19 = vsyncpa %s18, 0
    loop: start=0, step=1, limit=4
    $region2: #{tpu_custom_call.1} parent=1 // loop_pre_header
      _
    $region3: #{tpu_custom_call.1} parent=1 // loop_header
      %s21 = sphi 0, %s25
      %p22 = scmp.ge.s32.totalorder %s21, 4
      %s31 = sphi 0, %s33
      %s34 = sphi 0, %s31
      %s35 = sphi 0, %s34
      %s51 = sphi 0, %s35
      %s55 = sphi 0, %s55
      %s57 = sphi 0, %s55
      %s58 = sphi 0, %s57
      %s72 = sphi 0, %s58
      %s76 = sphi 0, %s76
      %s78 = sphi 0, %s76
      %s79 = sphi 0, %s78
      %s93 = sphi 0, %s79
      %s97 = sphi 0, %s97
      %s99 = sphi 0, %s97
      %s100 = sphi 0, %s99
      %s114 = sphi 0, %s100
      %s118 = sphi 0, %s118
      %s120 = sphi 0, %s118
      %s121 = sphi 0, %s120
      %s135 = sphi 0, %s121
      %s139 = sphi 0, %s139
      %s141 = sphi 0, %s139
      %s142 = sphi 0, %s141
      %s156 = sphi 0, %s142
      %s160 = sphi 0, %s160
      %s162 = sphi 0, %s160
      %s163 = sphi 0, %s162
      %s177 = sphi 0, %s163
      %s183 = sphi 0, %s185
      %s186 = sphi 0, %s183
      %s187 = sphi 0, %s186
      %s203 = sphi 0, %s187
    $region4: #{tpu_custom_call.1} parent=1 // loop_header_branch
      %24 = sbr.rel (%p22) target = $region8
    $region5: #{tpu_custom_call.1} parent=1 // loop_body
      %s26 = ssub.s32 %s21, 1
      %s27 = ssub.s32 %s21, 2
      %s28 = sadd.s32 %s21, 1
      %s29 = ssub.s32 %s21, %s28
      %p30 = scmp.eq.s32.totalorder %s29, 0
      %s32 = sadd.s32 %s31, 1
      %s33 = scalar_select %p30, %s31, %s32
      %p36 = pneg %p30
      %p37 = scmp.eq.s32.totalorder %s21, 1
      %p38 = por %p36, %p37
      %p39 = scmp.ne.s32.totalorder %s31, %s34
      %p40 = scmp.eq.s32.totalorder %s21, 0
      %p41 = por %p39, %p40
      %p42 = scmp.ne.s32.totalorder %s31, %s34
      %p43 = scmp.eq.s32.totalorder %s26, 1
      %p44 = por %p42, %p43
      %p45 = scmp.ne.s32.totalorder %s34, %s35
      %p46 = scmp.eq.s32.totalorder %s26, 0
      %p47 = por %p45, %p46
      %p48 = scmp.ne.s32.totalorder %s34, %s35
      %p49 = scmp.eq.s32.totalorder %s27, 1
      %p50 = por %p48, %p49
      %p52 = scmp.ne.s32.totalorder %s35, %s51
      %p53 = scmp.eq.s32.totalorder %s27, 0
      %p54 = por %p52, %p53
      %s56 = sadd.s32 %s55, 1
      %p59 = scmp.eq.s32.totalorder %s21, 1
      %p60 = scmp.ne.s32.totalorder %s55, %s57
      %p61 = scmp.eq.s32.totalorder %s21, 0
      %p62 = por %p60, %p61
      %p63 = scmp.ne.s32.totalorder %s55, %s57
      %p64 = scmp.eq.s32.totalorder %s26, 1
      %p65 = por %p63, %p64
      %p66 = scmp.ne.s32.totalorder %s57, %s58
      %p67 = scmp.eq.s32.totalorder %s26, 0
      %p68 = por %p66, %p67
      %p69 = scmp.ne.s32.totalorder %s57, %s58
      %p70 = scmp.eq.s32.totalorder %s27, 1
      %p71 = por %p69, %p70
      %p73 = scmp.ne.s32.totalorder %s58, %s72
      %p74 = scmp.eq.s32.totalorder %s27, 0
      %p75 = por %p73, %p74
      %s77 = sadd.s32 %s76, 1
      %p80 = scmp.eq.s32.totalorder %s21, 1
      %p81 = scmp.ne.s32.totalorder %s76, %s78
      %p82 = scmp.eq.s32.totalorder %s21, 0
      %p83 = por %p81, %p82
      %p84 = scmp.ne.s32.totalorder %s76, %s78
      %p85 = scmp.eq.s32.totalorder %s26, 1
      %p86 = por %p84, %p85
      %p87 = scmp.ne.s32.totalorder %s78, %s79
      %p88 = scmp.eq.s32.totalorder %s26, 0
      %p89 = por %p87, %p88
      %p90 = scmp.ne.s32.totalorder %s78, %s79
      %p91 = scmp.eq.s32.totalorder %s27, 1
      %p92 = por %p90, %p91
      %p94 = scmp.ne.s32.totalorder %s79, %s93
      %p95 = scmp.eq.s32.totalorder %s27, 0
      %p96 = por %p94, %p95
      %s98 = sadd.s32 %s97, 1
      %p101 = scmp.eq.s32.totalorder %s21, 1
      %p102 = scmp.ne.s32.totalorder %s97, %s99
      %p103 = scmp.eq.s32.totalorder %s21, 0
      %p104 = por %p102, %p103
      %p105 = scmp.ne.s32.totalorder %s97, %s99
      %p106 = scmp.eq.s32.totalorder %s26, 1
      %p107 = por %p105, %p106
      %p108 = scmp.ne.s32.totalorder %s99, %s100
      %p109 = scmp.eq.s32.totalorder %s26, 0
      %p110 = por %p108, %p109
      %p111 = scmp.ne.s32.totalorder %s99, %s100
      %p112 = scmp.eq.s32.totalorder %s27, 1
      %p113 = por %p111, %p112
      %p115 = scmp.ne.s32.totalorder %s100, %s114
      %p116 = scmp.eq.s32.totalorder %s27, 0
      %p117 = por %p115, %p116
      %s119 = sadd.s32 %s118, 1
      %p122 = scmp.eq.s32.totalorder %s21, 1
      %p123 = scmp.ne.s32.totalorder %s118, %s120
      %p124 = scmp.eq.s32.totalorder %s21, 0
      %p125 = por %p123, %p124
      %p126 = scmp.ne.s32.totalorder %s118, %s120
      %p127 = scmp.eq.s32.totalorder %s26, 1
      %p128 = por %p126, %p127
      %p129 = scmp.ne.s32.totalorder %s120, %s121
      %p130 = scmp.eq.s32.totalorder %s26, 0
      %p131 = por %p129, %p130
      %p132 = scmp.ne.s32.totalorder %s120, %s121
      %p133 = scmp.eq.s32.totalorder %s27, 1
      %p134 = por %p132, %p133
      %p136 = scmp.ne.s32.totalorder %s121, %s135
      %p137 = scmp.eq.s32.totalorder %s27, 0
      %p138 = por %p136, %p137
      %s140 = sadd.s32 %s139, 1
      %p143 = scmp.eq.s32.totalorder %s21, 1
      %p144 = scmp.ne.s32.totalorder %s139, %s141
      %p145 = scmp.eq.s32.totalorder %s21, 0
      %p146 = por %p144, %p145
      %p147 = scmp.ne.s32.totalorder %s139, %s141
      %p148 = scmp.eq.s32.totalorder %s26, 1
      %p149 = por %p147, %p148
      %p150 = scmp.ne.s32.totalorder %s141, %s142
      %p151 = scmp.eq.s32.totalorder %s26, 0
      %p152 = por %p150, %p151
      %p153 = scmp.ne.s32.totalorder %s141, %s142
      %p154 = scmp.eq.s32.totalorder %s27, 1
      %p155 = por %p153, %p154
      %p157 = scmp.ne.s32.totalorder %s142, %s156
      %p158 = scmp.eq.s32.totalorder %s27, 0
      %p159 = por %p157, %p158
      %s161 = sadd.s32 %s160, 1
      %p164 = scmp.eq.s32.totalorder %s21, 1
      %p165 = scmp.ne.s32.totalorder %s160, %s162
      %p166 = scmp.eq.s32.totalorder %s21, 0
      %p167 = por %p165, %p166
      %p168 = scmp.ne.s32.totalorder %s160, %s162
      %p169 = scmp.eq.s32.totalorder %s26, 1
      %p170 = por %p168, %p169
      %p171 = scmp.ne.s32.totalorder %s162, %s163
      %p172 = scmp.eq.s32.totalorder %s26, 0
      %p173 = por %p171, %p172
      %p174 = scmp.ne.s32.totalorder %s162, %s163
      %p175 = scmp.eq.s32.totalorder %s27, 1
      %p176 = por %p174, %p175
      %p178 = scmp.ne.s32.totalorder %s163, %s177
      %p179 = scmp.eq.s32.totalorder %s27, 0
      %p180 = por %p178, %p179
      %s181 = ssub.s32 %s21, %s28
      %p182 = scmp.eq.s32.totalorder %s181, 0
      %s184 = sadd.s32 %s183, 1
      %s185 = scalar_select %p182, %s183, %s184
      %p188 = pneg %p182
      %p189 = scmp.eq.s32.totalorder %s21, 1
      %p190 = por %p188, %p189
      %p191 = scmp.ne.s32.totalorder %s183, %s186
      %p192 = scmp.eq.s32.totalorder %s21, 0
      %p193 = por %p191, %p192
      %p194 = scmp.ne.s32.totalorder %s183, %s186
      %p195 = scmp.eq.s32.totalorder %s26, 1
      %p196 = por %p194, %p195
      %p197 = scmp.ne.s32.totalorder %s186, %s187
      %p198 = scmp.eq.s32.totalorder %s26, 0
      %p199 = por %p197, %p198
      %p200 = scmp.ne.s32.totalorder %s186, %s187
      %p201 = scmp.eq.s32.totalorder %s27, 1
      %p202 = por %p200, %p201
      %p204 = scmp.ne.s32.totalorder %s187, %s203
      %p205 = scmp.eq.s32.totalorder %s27, 0
      %p206 = por %p204, %p205
      %p207 = scmp.le.s32.totalorder 1, %s21
      %p208 = scmp.lt.s32.totalorder %s21, 3
      %p209 = pnand %p207, %p208
      %p210 = pneg %p209
      // Predicated region
      $region9: #{tpu_custom_call.1} parent=5 // pred_check
        _
      $region10: #{tpu_custom_call.1} parent=5 // pred_check_branch
        %212 = sbr.rel (%p209) target = $region12
      $region11: #{tpu_custom_call.1} parent=5 // pred_region
        %s213 = ssub.s32 %s21, 1
        // Predicated region
        $region13: #{tpu_custom_call.1} parent=11 // pred_check
          %p214 = pneg %p68
        $region14: #{tpu_custom_call.1} parent=11 // pred_check_branch
          %216 = sbr.rel (%p214) target = $region16
        $region15: #{tpu_custom_call.1} parent=11 // pred_region
          %s218 = ssub.s32 1024, 1024
          %219 = vsyncadd [#allocation6], %s218
          %s220 = sshll.u32 [#allocation5], 4
          %s221 = int_to_ptr.vmem [resolvable:$true] %s220
          %226 = dma.hbm_to_vmem [thread:$0]  %s1, 1024, %s221, [#allocation6], 64, 64, 4
        $region16: #{tpu_custom_call.1} parent=11 // pred_fallthru
          _
        // Predicated region
        $region17: #{tpu_custom_call.1} parent=11 // pred_check
          %p227 = pneg %p89
        $region18: #{tpu_custom_call.1} parent=11 // pred_check_branch
          %229 = sbr.rel (%p227) target = $region20
        $region19: #{tpu_custom_call.1} parent=11 // pred_region
          _
        $region20: #{tpu_custom_call.1} parent=11 // pred_fallthru
          _
        // Predicated region
        $region21: #{tpu_custom_call.1} parent=11 // pred_check
          %p230 = pneg %p110
        $region22: #{tpu_custom_call.1} parent=11 // pred_check_branch
          %232 = sbr.rel (%p230) target = $region24
        $region23: #{tpu_custom_call.1} parent=11 // pred_region
          %s234 = ssub.s32 1024, 1024
          %235 = vsyncadd [#allocation6], %s234
          %s236 = sshll.u32 [#allocation7], 4
          %s237 = int_to_ptr.vmem [resolvable:$true] %s236
          %242 = dma.hbm_to_vmem [thread:$0]  %s3, 1024, %s237, [#allocation6], 64, 64, 4
        $region24: #{tpu_custom_call.1} parent=11 // pred_fallthru
          _
        // Predicated region
        $region25: #{tpu_custom_call.1} parent=11 // pred_check
          %p243 = pneg %p131
        $region26: #{tpu_custom_call.1} parent=11 // pred_check_branch
          %245 = sbr.rel (%p243) target = $region28
        $region27: #{tpu_custom_call.1} parent=11 // pred_region
          _
        $region28: #{tpu_custom_call.1} parent=11 // pred_fallthru
          _
        // Predicated region
        $region29: #{tpu_custom_call.1} parent=11 // pred_check
          %p246 = pneg %p152
        $region30: #{tpu_custom_call.1} parent=11 // pred_check_branch
          %248 = sbr.rel (%p246) target = $region32
        $region31: #{tpu_custom_call.1} parent=11 // pred_region
          %s250 = ssub.s32 1024, 1024
          %251 = vsyncadd [#allocation9], %s250
          %s252 = sshll.u32 [#allocation8], 4
          %s253 = int_to_ptr.vmem [resolvable:$true] %s252
          %258 = dma.hbm_to_vmem [thread:$0]  %s5, 1024, %s253, [#allocation9], 64, 64, 4
        $region32: #{tpu_custom_call.1} parent=11 // pred_fallthru
          _
        // Predicated region
        $region33: #{tpu_custom_call.1} parent=11 // pred_check
          %p259 = pneg %p173
        $region34: #{tpu_custom_call.1} parent=11 // pred_check_branch
          %261 = sbr.rel (%p259) target = $region36
        $region35: #{tpu_custom_call.1} parent=11 // pred_region
          _
        $region36: #{tpu_custom_call.1} parent=11 // pred_fallthru
          _
      $region12: #{tpu_custom_call.1} parent=5 // pred_fallthru
        _
      %p262 = scmp.lt.s32.totalorder %s21, 2
      // Predicated region
      $region37: #{tpu_custom_call.1} parent=5 // pred_check
        %p263 = pneg %p262
      $region38: #{tpu_custom_call.1} parent=5 // pred_check_branch
        %265 = sbr.rel (%p263) target = $region40
      $region39: #{tpu_custom_call.1} parent=5 // pred_region
        // Predicated region
        $region41: #{tpu_custom_call.1} parent=39 // pred_check
          %p266 = pneg %p41
        $region42: #{tpu_custom_call.1} parent=39 // pred_check_branch
          %268 = sbr.rel (%p266) target = $region44
        $region43: #{tpu_custom_call.1} parent=39 // pred_region
          %s269 = sand.u32 %s31, 1
          %s270 = scalar_lea.sflag [#allocation3], %s269
          %s271 = sand.u32 %s31, 1
          %s272 = smul.addr %s271, 128
          %s273 = scalar_lea.vmem [#allocation2], %s272
          %s274 = smul.u32 16, %s21
          %s276 = ssub.s32 2048, 2048
          %277 = vsyncadd %s270, %s276
          %s278 = smul.addr %s274, 128
          %s279 = scalar_lea.hbm %s0, %s278
          %s280 = sshll.u32 %s273, 4
          %s281 = int_to_ptr.vmem [resolvable:$true] %s280
          %286 = dma.hbm_to_vmem [thread:$0]  %s279, 2048, %s281, %s270, 128, 128, 8
        $region44: #{tpu_custom_call.1} parent=39 // pred_fallthru
          _
      $region40: #{tpu_custom_call.1} parent=5 // pred_fallthru
        _
      %p287 = scmp.le.s32.totalorder 1, %s21
      %p288 = scmp.lt.s32.totalorder %s21, 3
      %p289 = pnand %p287, %p288
      %p290 = pneg %p289
      // Predicated region
      $region45: #{tpu_custom_call.1} parent=5 // pred_check
        _
      $region46: #{tpu_custom_call.1} parent=5 // pred_check_branch
        %292 = sbr.rel (%p289) target = $region48
      $region47: #{tpu_custom_call.1} parent=5 // pred_region
        %s293 = ssub.s32 %s21, 1
        %s294 = sand.u32 %s34, 1
        %s295 = scalar_lea.sflag [#allocation3], %s294
        %s296 = sand.u32 %s34, 1
        %s297 = smul.addr %s296, 128
        %s298 = scalar_lea.vmem [#allocation2], %s297
        // Predicated region
        $region49: #{tpu_custom_call.1} parent=47 // pred_check
          %p299 = pneg %p47
        $region50: #{tpu_custom_call.1} parent=47 // pred_check_branch
          %301 = sbr.rel (%p299) target = $region52
        $region51: #{tpu_custom_call.1} parent=47 // pred_region
          %302 = dma.done %s295, 2048
        $region52: #{tpu_custom_call.1} parent=47 // pred_fallthru
          _
        // Predicated region
        $region53: #{tpu_custom_call.1} parent=47 // pred_check
          %p303 = pneg %p68
        $region54: #{tpu_custom_call.1} parent=47 // pred_check_branch
          %305 = sbr.rel (%p303) target = $region56
        $region55: #{tpu_custom_call.1} parent=47 // pred_region
          %306 = dma.done [#allocation6], 1024
        $region56: #{tpu_custom_call.1} parent=47 // pred_fallthru
          _
        // Predicated region
        $region57: #{tpu_custom_call.1} parent=47 // pred_check
          %p307 = pneg %p110
        $region58: #{tpu_custom_call.1} parent=47 // pred_check_branch
          %309 = sbr.rel (%p307) target = $region60
        $region59: #{tpu_custom_call.1} parent=47 // pred_region
          %310 = dma.done [#allocation6], 1024
        $region60: #{tpu_custom_call.1} parent=47 // pred_fallthru
          _
        // Predicated region
        $region61: #{tpu_custom_call.1} parent=47 // pred_check
          %p311 = pneg %p152
        $region62: #{tpu_custom_call.1} parent=47 // pred_check_branch
          %313 = sbr.rel (%p311) target = $region64
        $region63: #{tpu_custom_call.1} parent=47 // pred_region
          %314 = dma.done [#allocation9], 1024
        $region64: #{tpu_custom_call.1} parent=47 // pred_fallthru
          _
        %s315 = sand.u32 %s34, 1
        %s316 = scalar_lea.sflag [#allocation3], %s315
        %s317 = sand.u32 %s34, 1
        %s318 = smul.addr %s317, 128
        %s319 = scalar_lea.vmem [#allocation2], %s318
        %p320 = pneg %p47
        %p321 = pneg %p44
        %p322 = pneg %p68
        %p323 = pneg %p65
        %p324 = pneg %p89
        %p325 = pneg %p86
        %p326 = pneg %p110
        %p327 = pneg %p107
        %p328 = pneg %p131
        %p329 = pneg %p128
        %p330 = pneg %p152
        %p331 = pneg %p149
        %p332 = pneg %p173
        %p333 = pneg %p170
        %p334 = pneg %p199
        %p335 = pneg %p196
        %s336 = sand.u32 %s186, 1
        %s337 = scalar_lea.sflag [#allocation4], %s336
        %s338 = sand.u32 %s186, 1
        %s339 = smul.addr %s338, 128
        %s340 = scalar_lea.vmem [#allocation10], %s339
        %s341 = smul.u32 16, %s26
        %s342 = smul.u32 16, %s26
        %v344 = vld [vmem:[%s298] sm:$0xff]
        %v345 = vld [vmem:[%s298 + $0x8] sm:$0xff]
        %v346 = vld [vmem:[%s298 + $0x10] sm:$0xff]
        %v347 = vld [vmem:[%s298 + $0x18] sm:$0xff]
        %v348 = vld [vmem:[%s298 + $0x20] sm:$0xff]
        %v349 = vld [vmem:[%s298 + $0x28] sm:$0xff]
        %v350 = vld [vmem:[%s298 + $0x30] sm:$0xff]
        %v351 = vld [vmem:[%s298 + $0x38] sm:$0xff]
        %v352 = vld [vmem:[%s298 + $0x40] sm:$0xff]
        %v353 = vld [vmem:[%s298 + $0x48] sm:$0xff]
        %v354 = vld [vmem:[%s298 + $0x50] sm:$0xff]
        %v355 = vld [vmem:[%s298 + $0x58] sm:$0xff]
        %v356 = vld [vmem:[%s298 + $0x60] sm:$0xff]
        %v357 = vld [vmem:[%s298 + $0x68] sm:$0xff]
        %v358 = vld [vmem:[%s298 + $0x70] sm:$0xff]
        %v359 = vld [vmem:[%s298 + $0x78] sm:$0xff]
        %v360 = vpack.c.bf16 %v345, %v344
        %v361 = vpack.c.bf16 %v347, %v346
        %v362 = vpack.c.bf16 %v349, %v348
        %v363 = vpack.c.bf16 %v351, %v350
        %v364 = vpack.c.bf16 %v353, %v352
        %v365 = vpack.c.bf16 %v355, %v354
        %v366 = vpack.c.bf16 %v357, %v356
        %v367 = vpack.c.bf16 %v359, %v358
        %v368 = vld [vmem:[#allocation5] sm:$0xf]
        %v369 = vld [vmem:[#allocation5 + $0x4] sm:$0xf]
        %v370 = vld [vmem:[#allocation5 + $0x8] sm:$0xf]
        %v371 = vld [vmem:[#allocation5 + $0xc] sm:$0xf]
        %v372 = vld [vmem:[#allocation5 + $0x10] sm:$0xf]
        %v373 = vld [vmem:[#allocation5 + $0x14] sm:$0xf]
        %v374 = vld [vmem:[#allocation5 + $0x18] sm:$0xf]
        %v375 = vld [vmem:[#allocation5 + $0x1c] sm:$0xf]
        %v376 = vld [vmem:[#allocation5 + $0x20] sm:$0xf]
        %v377 = vld [vmem:[#allocation5 + $0x24] sm:$0xf]
        %v378 = vld [vmem:[#allocation5 + $0x28] sm:$0xf]
        %v379 = vld [vmem:[#allocation5 + $0x2c] sm:$0xf]
        %v380 = vld [vmem:[#allocation5 + $0x30] sm:$0xf]
        %v381 = vld [vmem:[#allocation5 + $0x34] sm:$0xf]
        %v382 = vld [vmem:[#allocation5 + $0x38] sm:$0xf]
        %v383 = vld [vmem:[#allocation5 + $0x3c] sm:$0xf]
        %v384 = vld [vmem:[%s2] sm:$0x1]
        %v386 = vlaneseq
        %v387 = vshrl.u32 %v386, 7
        %v388 = vsub.s32 0, %v387
        %v389 = vrot.slane %v384, %v388
        %v407 = vunpack.c.l.b16 %v368
        %v408 = vunpack.c.l.b16 %v369
        %v409 = vunpack.c.l.b16 %v370
        %v410 = vunpack.c.l.b16 %v371
        %v411 = vunpack.c.l.b16 %v372
        %v412 = vunpack.c.l.b16 %v373
        %v413 = vunpack.c.l.b16 %v374
        %v414 = vunpack.c.l.b16 %v375
        %v415 = vunpack.c.l.b16 %v376
        %v416 = vunpack.c.l.b16 %v377
        %v417 = vunpack.c.l.b16 %v378
        %v418 = vunpack.c.l.b16 %v379
        %v419 = vunpack.c.l.b16 %v380
        %v420 = vunpack.c.l.b16 %v381
        %v421 = vunpack.c.l.b16 %v382
        %v422 = vunpack.c.l.b16 %v383
        %v423 = vpack.c.b16 %v408, %v407
        %v424 = vpack.c.b16 %v410, %v409
        %v425 = vpack.c.b16 %v412, %v411
        %v426 = vpack.c.b16 %v414, %v413
        %v427 = vpack.c.b16 %v416, %v415
        %v428 = vpack.c.b16 %v418, %v417
        %v429 = vpack.c.b16 %v420, %v419
        %v430 = vpack.c.b16 %v422, %v421
        %439 = vmatprep.subr.bf16.mxu0 0
        %440 = vmatpush1.bf16.msra.mxu0 %v423
        %441 = vmatprep.subr.bf16.mxu0 0
        %442 = vmatpush1.bf16.msra.mxu0 %v424
        %443 = vmatprep.subr.bf16.mxu0 0
        %444 = vmatpush1.bf16.msra.mxu0 %v425
        %445 = vmatprep.subr.bf16.mxu0 0
        %446 = vmatpush1.bf16.msra.mxu0 %v426
        %447 = vmatprep.subr.bf16.mxu0 0
        %448 = vmatpush1.bf16.msra.mxu0 %v427
        %449 = vmatprep.subr.bf16.mxu0 0
        %450 = vmatpush1.bf16.msra.mxu0 %v428
        %451 = vmatprep.subr.bf16.mxu0 0
        %452 = vmatpush1.bf16.msra.mxu0 %v429
        %453 = vmatprep.subr.bf16.mxu0 0
        %454 = vmatpush1.bf16.msra.mxu0 %v430
        %455 = vmatprep.subr.bf16.mxu0 0
        %456 = vmatpush1.bf16.msra.mxu0 0
        %457 = vmatprep.subr.bf16.mxu0 0
        %458 = vmatpush1.bf16.msra.mxu0 0
        %459 = vmatprep.subr.bf16.mxu0 0
        %460 = vmatpush1.bf16.msra.mxu0 0
        %461 = vmatprep.subr.bf16.mxu0 0
        %462 = vmatpush1.bf16.msra.mxu0 0
        %463 = vmatprep.subr.bf16.mxu0 0
        %464 = vmatpush1.bf16.msra.mxu0 0
        %465 = vmatprep.subr.bf16.mxu0 0
        %466 = vmatpush1.bf16.msra.mxu0 0
        %467 = vmatprep.subr.bf16.mxu0 0
        %468 = vmatpush1.bf16.msra.mxu0 0
        %469 = vmatprep.subr.bf16.mxu0 0
        %470 = vmatpush1.bf16.msra.mxu0 0
        %471 = vmatprep.mubr.bf16.mxu0 0
        %472 = vmatmul.mubr.bf16.gmra.mrb[0].mxu0 %v360
        %v473 = vpop.f32.mrb[0].mxu0
        %v474 = vadd.f32 %v389, %v473
        %v475 = vpop.f32.mrb[0].mxu0
        %v476 = vpop.f32.mrb[0].mxu0
        %v477 = vadd.f32 %v389, %v476
        %v478 = vpop.f32.mrb[0].mxu0
        %479 = vmatprep.mubr.bf16.mxu0 0
        %480 = vmatmul.mubr.bf16.gmra.mrb[0].mxu0 %v361
        %v481 = vpop.f32.mrb[0].mxu0
        %v482 = vadd.f32 %v389, %v481
        %v483 = vpop.f32.mrb[0].mxu0
        %v484 = vpop.f32.mrb[0].mxu0
        %v485 = vadd.f32 %v389, %v484
        %v486 = vpop.f32.mrb[0].mxu0
        %487 = vmatprep.mubr.bf16.mxu0 0
        %488 = vmatmul.mubr.bf16.gmra.mrb[0].mxu0 %v362
        %v489 = vpop.f32.mrb[0].mxu0
        %v490 = vadd.f32 %v389, %v489
        %v491 = vpop.f32.mrb[0].mxu0
        %v492 = vpop.f32.mrb[0].mxu0
        %v493 = vadd.f32 %v389, %v492
        %v494 = vpop.f32.mrb[0].mxu0
        %495 = vmatprep.mubr.bf16.mxu0 0
        %496 = vmatmul.mubr.bf16.gmra.mrb[0].mxu0 %v363
        %v497 = vpop.f32.mrb[0].mxu0
        %v498 = vadd.f32 %v389, %v497
        %v499 = vpop.f32.mrb[0].mxu0
        %v500 = vpop.f32.mrb[0].mxu0
        %v501 = vadd.f32 %v389, %v500
        %v502 = vpop.f32.mrb[0].mxu0
        %503 = vmatprep.mubr.bf16.mxu0 0
        %504 = vmatmul.mubr.bf16.gmra.mrb[0].mxu0 %v364
        %v505 = vpop.f32.mrb[0].mxu0
        %v506 = vadd.f32 %v389, %v505
        %v507 = vpop.f32.mrb[0].mxu0
        %v508 = vpop.f32.mrb[0].mxu0
        %v509 = vadd.f32 %v389, %v508
        %v510 = vpop.f32.mrb[0].mxu0
        %511 = vmatprep.mubr.bf16.mxu0 0
        %512 = vmatmul.mubr.bf16.gmra.mrb[0].mxu0 %v365
        %v513 = vpop.f32.mrb[0].mxu0
        %v514 = vadd.f32 %v389, %v513
        %v515 = vpop.f32.mrb[0].mxu0
        %v516 = vpop.f32.mrb[0].mxu0
        %v517 = vadd.f32 %v389, %v516
        %v518 = vpop.f32.mrb[0].mxu0
        %519 = vmatprep.mubr.bf16.mxu0 0
        %520 = vmatmul.mubr.bf16.gmra.mrb[0].mxu0 %v366
        %v521 = vpop.f32.mrb[0].mxu0
        %v522 = vadd.f32 %v389, %v521
        %v523 = vpop.f32.mrb[0].mxu0
        %v524 = vpop.f32.mrb[0].mxu0
        %v525 = vadd.f32 %v389, %v524
        %v526 = vpop.f32.mrb[0].mxu0
        %527 = vmatprep.mubr.bf16.mxu0 0
        %528 = vmatmul.mubr.bf16.gmra.mrb[0].mxu0 %v367
        %v529 = vpop.f32.mrb[0].mxu0
        %v530 = vadd.f32 %v389, %v529
        %v531 = vpop.f32.mrb[0].mxu0
        %v532 = vpop.f32.mrb[0].mxu0
        %v533 = vadd.f32 %v389, %v532
        %v534 = vpop.f32.mrb[0].mxu0
        %535 = vdwg.mxu0
        %v536 = vtanh.pop %v474
        %v537 = vtanh.pop %v477
        %v538 = vtanh.pop %v482
        %v539 = vtanh.pop %v485
        %v540 = vtanh.pop %v490
        %v541 = vtanh.pop %v493
        %v542 = vtanh.pop %v498
        %v543 = vtanh.pop %v501
        %v544 = vtanh.pop %v506
        %v545 = vtanh.pop %v509
        %v546 = vtanh.pop %v514
        %v547 = vtanh.pop %v517
        %v548 = vtanh.pop %v522
        %v549 = vtanh.pop %v525
        %v550 = vtanh.pop %v530
        %v551 = vtanh.pop %v533
        %v552 = vpack.c.bf16 %v537, %v536
        %v553 = vpack.c.bf16 %v539, %v538
        %v554 = vpack.c.bf16 %v541, %v540
        %v555 = vpack.c.bf16 %v543, %v542
        %v556 = vpack.c.bf16 %v545, %v544
        %v557 = vpack.c.bf16 %v547, %v546
        %v558 = vpack.c.bf16 %v549, %v548
        %v559 = vpack.c.bf16 %v551, %v550
        %v560 = vld [vmem:[#allocation7] sm:$0xf]
        %v561 = vld [vmem:[#allocation7 + $0x4] sm:$0xf]
        %v562 = vld [vmem:[#allocation7 + $0x8] sm:$0xf]
        %v563 = vld [vmem:[#allocation7 + $0xc] sm:$0xf]
        %v564 = vld [vmem:[#allocation7 + $0x10] sm:$0xf]
        %v565 = vld [vmem:[#allocation7 + $0x14] sm:$0xf]
        %v566 = vld [vmem:[#allocation7 + $0x18] sm:$0xf]
        %v567 = vld [vmem:[#allocation7 + $0x1c] sm:$0xf]
        %v568 = vld [vmem:[#allocation7 + $0x20] sm:$0xf]
        %v569 = vld [vmem:[#allocation7 + $0x24] sm:$0xf]
        %v570 = vld [vmem:[#allocation7 + $0x28] sm:$0xf]
        %v571 = vld [vmem:[#allocation7 + $0x2c] sm:$0xf]
        %v572 = vld [vmem:[#allocation7 + $0x30] sm:$0xf]
        %v573 = vld [vmem:[#allocation7 + $0x34] sm:$0xf]
        %v574 = vld [vmem:[#allocation7 + $0x38] sm:$0xf]
        %v575 = vld [vmem:[#allocation7 + $0x3c] sm:$0xf]
        %v576 = vld [vmem:[%s4] sm:$0x1]
        %v578 = vlaneseq
        %v579 = vshrl.u32 %v578, 7
        %v580 = vsub.s32 0, %v579
        %v581 = vrot.slane %v576, %v580
        %v599 = vunpack.c.l.b16 %v560
        %v600 = vunpack.c.l.b16 %v561
        %v601 = vunpack.c.l.b16 %v562
        %v602 = vunpack.c.l.b16 %v563
        %v603 = vunpack.c.l.b16 %v564
        %v604 = vunpack.c.l.b16 %v565
        %v605 = vunpack.c.l.b16 %v566
        %v606 = vunpack.c.l.b16 %v567
        %v607 = vunpack.c.l.b16 %v568
        %v608 = vunpack.c.l.b16 %v569
        %v609 = vunpack.c.l.b16 %v570
        %v610 = vunpack.c.l.b16 %v571
        %v611 = vunpack.c.l.b16 %v572
        %v612 = vunpack.c.l.b16 %v573
        %v613 = vunpack.c.l.b16 %v574
        %v614 = vunpack.c.l.b16 %v575
        %v615 = vpack.c.b16 %v600, %v599
        %v616 = vpack.c.b16 %v602, %v601
        %v617 = vpack.c.b16 %v604, %v603
        %v618 = vpack.c.b16 %v606, %v605
        %v619 = vpack.c.b16 %v608, %v607
        %v620 = vpack.c.b16 %v610, %v609
        %v621 = vpack.c.b16 %v612, %v611
        %v622 = vpack.c.b16 %v614, %v613
        %631 = vmatprep.subr.bf16.mxu0 0
        %632 = vmatpush1.bf16.msra.mxu0 %v615
        %633 = vmatprep.subr.bf16.mxu0 0
        %634 = vmatpush1.bf16.msra.mxu0 %v616
        %635 = vmatprep.subr.bf16.mxu0 0
        %636 = vmatpush1.bf16.msra.mxu0 %v617
        %637 = vmatprep.subr.bf16.mxu0 0
        %638 = vmatpush1.bf16.msra.mxu0 %v618
        %639 = vmatprep.subr.bf16.mxu0 0
        %640 = vmatpush1.bf16.msra.mxu0 %v619
        %641 = vmatprep.subr.bf16.mxu0 0
        %642 = vmatpush1.bf16.msra.mxu0 %v620
        %643 = vmatprep.subr.bf16.mxu0 0
        %644 = vmatpush1.bf16.msra.mxu0 %v621
        %645 = vmatprep.subr.bf16.mxu0 0
        %646 = vmatpush1.bf16.msra.mxu0 %v622
        %647 = vmatprep.subr.bf16.mxu0 0
        %648 = vmatpush1.bf16.msra.mxu0 0
        %649 = vmatprep.subr.bf16.mxu0 0
        %650 = vmatpush1.bf16.msra.mxu0 0
        %651 = vmatprep.subr.bf16.mxu0 0
        %652 = vmatpush1.bf16.msra.mxu0 0
        %653 = vmatprep.subr.bf16.mxu0 0
        %654 = vmatpush1.bf16.msra.mxu0 0
        %655 = vmatprep.subr.bf16.mxu0 0
        %656 = vmatpush1.bf16.msra.mxu0 0
        %657 = vmatprep.subr.bf16.mxu0 0
        %658 = vmatpush1.bf16.msra.mxu0 0
        %659 = vmatprep.subr.bf16.mxu0 0
        %660 = vmatpush1.bf16.msra.mxu0 0
        %661 = vmatprep.subr.bf16.mxu0 0
        %662 = vmatpush1.bf16.msra.mxu0 0
        %663 = vmatprep.mubr.bf16.mxu0 0
        %664 = vmatmul.mubr.bf16.gmra.mrb[0].mxu0 %v552
        %v665 = vpop.f32.mrb[0].mxu0
        %v666 = vadd.f32 %v581, %v665
        %v667 = vpop.f32.mrb[0].mxu0
        %v668 = vpop.f32.mrb[0].mxu0
        %v669 = vadd.f32 %v581, %v668
        %v670 = vpop.f32.mrb[0].mxu0
        %671 = vmatprep.mubr.bf16.mxu0 0
        %672 = vmatmul.mubr.bf16.gmra.mrb[0].mxu0 %v553
        %v673 = vpop.f32.mrb[0].mxu0
        %v674 = vadd.f32 %v581, %v673
        %v675 = vpop.f32.mrb[0].mxu0
        %v676 = vpop.f32.mrb[0].mxu0
        %v677 = vadd.f32 %v581, %v676
        %v678 = vpop.f32.mrb[0].mxu0
        %679 = vmatprep.mubr.bf16.mxu0 0
        %680 = vmatmul.mubr.bf16.gmra.mrb[0].mxu0 %v554
        %v681 = vpop.f32.mrb[0].mxu0
        %v682 = vadd.f32 %v581, %v681
        %v683 = vpop.f32.mrb[0].mxu0
        %v684 = vpop.f32.mrb[0].mxu0
        %v685 = vadd.f32 %v581, %v684
        %v686 = vpop.f32.mrb[0].mxu0
        %687 = vmatprep.mubr.bf16.mxu0 0
        %688 = vmatmul.mubr.bf16.gmra.mrb[0].mxu0 %v555
        %v689 = vpop.f32.mrb[0].mxu0
        %v690 = vadd.f32 %v581, %v689
        %v691 = vpop.f32.mrb[0].mxu0
        %v692 = vpop.f32.mrb[0].mxu0
        %v693 = vadd.f32 %v581, %v692
        %v694 = vpop.f32.mrb[0].mxu0
        %695 = vmatprep.mubr.bf16.mxu0 0
        %696 = vmatmul.mubr.bf16.gmra.mrb[0].mxu0 %v556
        %v697 = vpop.f32.mrb[0].mxu0
        %v698 = vadd.f32 %v581, %v697
        %v699 = vpop.f32.mrb[0].mxu0
        %v700 = vpop.f32.mrb[0].mxu0
        %v701 = vadd.f32 %v581, %v700
        %v702 = vpop.f32.mrb[0].mxu0
        %703 = vmatprep.mubr.bf16.mxu0 0
        %704 = vmatmul.mubr.bf16.gmra.mrb[0].mxu0 %v557
        %v705 = vpop.f32.mrb[0].mxu0
        %v706 = vadd.f32 %v581, %v705
        %v707 = vpop.f32.mrb[0].mxu0
        %v708 = vpop.f32.mrb[0].mxu0
        %v709 = vadd.f32 %v581, %v708
        %v710 = vpop.f32.mrb[0].mxu0
        %711 = vmatprep.mubr.bf16.mxu0 0
        %712 = vmatmul.mubr.bf16.gmra.mrb[0].mxu0 %v558
        %v713 = vpop.f32.mrb[0].mxu0
        %v714 = vadd.f32 %v581, %v713
        %v715 = vpop.f32.mrb[0].mxu0
        %v716 = vpop.f32.mrb[0].mxu0
        %v717 = vadd.f32 %v581, %v716
        %v718 = vpop.f32.mrb[0].mxu0
        %719 = vmatprep.mubr.bf16.mxu0 0
        %720 = vmatmul.mubr.bf16.gmra.mrb[0].mxu0 %v559
        %v721 = vpop.f32.mrb[0].mxu0
        %v722 = vadd.f32 %v581, %v721
        %v723 = vpop.f32.mrb[0].mxu0
        %v724 = vpop.f32.mrb[0].mxu0
        %v725 = vadd.f32 %v581, %v724
        %v726 = vpop.f32.mrb[0].mxu0
        %727 = vdwg.mxu0
        %v728 = vtanh.pop %v666
        %v729 = vtanh.pop %v669
        %v730 = vtanh.pop %v674
        %v731 = vtanh.pop %v677
        %v732 = vtanh.pop %v682
        %v733 = vtanh.pop %v685
        %v734 = vtanh.pop %v690
        %v735 = vtanh.pop %v693
        %v736 = vtanh.pop %v698
        %v737 = vtanh.pop %v701
        %v738 = vtanh.pop %v706
        %v739 = vtanh.pop %v709
        %v740 = vtanh.pop %v714
        %v741 = vtanh.pop %v717
        %v742 = vtanh.pop %v722
        %v743 = vtanh.pop %v725
        %v744 = vpack.c.bf16 %v729, %v728
        %v745 = vpack.c.bf16 %v731, %v730
        %v746 = vpack.c.bf16 %v733, %v732
        %v747 = vpack.c.bf16 %v735, %v734
        %v748 = vpack.c.bf16 %v737, %v736
        %v749 = vpack.c.bf16 %v739, %v738
        %v750 = vpack.c.bf16 %v741, %v740
        %v751 = vpack.c.bf16 %v743, %v742
        %v752 = vld [vmem:[#allocation8] sm:$0xf]
        %v753 = vld [vmem:[#allocation8 + $0x4] sm:$0xf]
        %v754 = vld [vmem:[#allocation8 + $0x8] sm:$0xf]
        %v755 = vld [vmem:[#allocation8 + $0xc] sm:$0xf]
        %v756 = vld [vmem:[#allocation8 + $0x10] sm:$0xf]
        %v757 = vld [vmem:[#allocation8 + $0x14] sm:$0xf]
        %v758 = vld [vmem:[#allocation8 + $0x18] sm:$0xf]
        %v759 = vld [vmem:[#allocation8 + $0x1c] sm:$0xf]
        %v760 = vld [vmem:[#allocation8 + $0x20] sm:$0xf]
        %v761 = vld [vmem:[#allocation8 + $0x24] sm:$0xf]
        %v762 = vld [vmem:[#allocation8 + $0x28] sm:$0xf]
        %v763 = vld [vmem:[#allocation8 + $0x2c] sm:$0xf]
        %v764 = vld [vmem:[#allocation8 + $0x30] sm:$0xf]
        %v765 = vld [vmem:[#allocation8 + $0x34] sm:$0xf]
        %v766 = vld [vmem:[#allocation8 + $0x38] sm:$0xf]
        %v767 = vld [vmem:[#allocation8 + $0x3c] sm:$0xf]
        %v768 = vld [vmem:[%s6] sm:$0x1]
        %v770 = vlaneseq
        %v771 = vshrl.u32 %v770, 7
        %v772 = vsub.s32 0, %v771
        %v773 = vrot.slane %v768, %v772
        %v791 = vunpack.c.l.b16 %v752
        %v792 = vunpack.c.l.b16 %v753
        %v793 = vunpack.c.l.b16 %v754
        %v794 = vunpack.c.l.b16 %v755
        %v795 = vunpack.c.l.b16 %v756
        %v796 = vunpack.c.l.b16 %v757
        %v797 = vunpack.c.l.b16 %v758
        %v798 = vunpack.c.l.b16 %v759
        %v799 = vunpack.c.l.b16 %v760
        %v800 = vunpack.c.l.b16 %v761
        %v801 = vunpack.c.l.b16 %v762
        %v802 = vunpack.c.l.b16 %v763
        %v803 = vunpack.c.l.b16 %v764
        %v804 = vunpack.c.l.b16 %v765
        %v805 = vunpack.c.l.b16 %v766
        %v806 = vunpack.c.l.b16 %v767
        %v807 = vpack.c.b16 %v792, %v791
        %v808 = vpack.c.b16 %v794, %v793
        %v809 = vpack.c.b16 %v796, %v795
        %v810 = vpack.c.b16 %v798, %v797
        %v811 = vpack.c.b16 %v800, %v799
        %v812 = vpack.c.b16 %v802, %v801
        %v813 = vpack.c.b16 %v804, %v803
        %v814 = vpack.c.b16 %v806, %v805
        %823 = vmatprep.subr.bf16.mxu0 0
        %824 = vmatpush1.bf16.msra.mxu0 %v807
        %825 = vmatprep.subr.bf16.mxu0 0
        %826 = vmatpush1.bf16.msra.mxu0 %v808
        %827 = vmatprep.subr.bf16.mxu0 0
        %828 = vmatpush1.bf16.msra.mxu0 %v809
        %829 = vmatprep.subr.bf16.mxu0 0
        %830 = vmatpush1.bf16.msra.mxu0 %v810
        %831 = vmatprep.subr.bf16.mxu0 0
        %832 = vmatpush1.bf16.msra.mxu0 %v811
        %833 = vmatprep.subr.bf16.mxu0 0
        %834 = vmatpush1.bf16.msra.mxu0 %v812
        %835 = vmatprep.subr.bf16.mxu0 0
        %836 = vmatpush1.bf16.msra.mxu0 %v813
        %837 = vmatprep.subr.bf16.mxu0 0
        %838 = vmatpush1.bf16.msra.mxu0 %v814
        %839 = vmatprep.subr.bf16.mxu0 0
        %840 = vmatpush1.bf16.msra.mxu0 0
        %841 = vmatprep.subr.bf16.mxu0 0
        %842 = vmatpush1.bf16.msra.mxu0 0
        %843 = vmatprep.subr.bf16.mxu0 0
        %844 = vmatpush1.bf16.msra.mxu0 0
        %845 = vmatprep.subr.bf16.mxu0 0
        %846 = vmatpush1.bf16.msra.mxu0 0
        %847 = vmatprep.subr.bf16.mxu0 0
        %848 = vmatpush1.bf16.msra.mxu0 0
        %849 = vmatprep.subr.bf16.mxu0 0
        %850 = vmatpush1.bf16.msra.mxu0 0
        %851 = vmatprep.subr.bf16.mxu0 0
        %852 = vmatpush1.bf16.msra.mxu0 0
        %853 = vmatprep.subr.bf16.mxu0 0
        %854 = vmatpush1.bf16.msra.mxu0 0
        %855 = vmatprep.mubr.bf16.mxu0 0
        %856 = vmatmul.mubr.bf16.gmra.mrb[0].mxu0 %v744
        %v857 = vpop.f32.mrb[0].mxu0
        %v858 = vadd.f32 %v773, %v857
        %v859 = vpop.f32.mrb[0].mxu0
        %v860 = vpop.f32.mrb[0].mxu0
        %v861 = vadd.f32 %v773, %v860
        %v862 = vpop.f32.mrb[0].mxu0
        %863 = vmatprep.mubr.bf16.mxu0 0
        %864 = vmatmul.mubr.bf16.gmra.mrb[0].mxu0 %v745
        %v865 = vpop.f32.mrb[0].mxu0
        %v866 = vadd.f32 %v773, %v865
        %v867 = vpop.f32.mrb[0].mxu0
        %v868 = vpop.f32.mrb[0].mxu0
        %v869 = vadd.f32 %v773, %v868
        %v870 = vpop.f32.mrb[0].mxu0
        %871 = vmatprep.mubr.bf16.mxu0 0
        %872 = vmatmul.mubr.bf16.gmra.mrb[0].mxu0 %v746
        %v873 = vpop.f32.mrb[0].mxu0
        %v874 = vadd.f32 %v773, %v873
        %v875 = vpop.f32.mrb[0].mxu0
        %v876 = vpop.f32.mrb[0].mxu0
        %v877 = vadd.f32 %v773, %v876
        %v878 = vpop.f32.mrb[0].mxu0
        %879 = vmatprep.mubr.bf16.mxu0 0
        %880 = vmatmul.mubr.bf16.gmra.mrb[0].mxu0 %v747
        %v881 = vpop.f32.mrb[0].mxu0
        %v882 = vadd.f32 %v773, %v881
        %v883 = vpop.f32.mrb[0].mxu0
        %v884 = vpop.f32.mrb[0].mxu0
        %v885 = vadd.f32 %v773, %v884
        %v886 = vpop.f32.mrb[0].mxu0
        %887 = vmatprep.mubr.bf16.mxu0 0
        %888 = vmatmul.mubr.bf16.gmra.mrb[0].mxu0 %v748
        %v889 = vpop.f32.mrb[0].mxu0
        %v890 = vadd.f32 %v773, %v889
        %v891 = vpop.f32.mrb[0].mxu0
        %v892 = vpop.f32.mrb[0].mxu0
        %v893 = vadd.f32 %v773, %v892
        %v894 = vpop.f32.mrb[0].mxu0
        %895 = vmatprep.mubr.bf16.mxu0 0
        %896 = vmatmul.mubr.bf16.gmra.mrb[0].mxu0 %v749
        %v897 = vpop.f32.mrb[0].mxu0
        %v898 = vadd.f32 %v773, %v897
        %v899 = vpop.f32.mrb[0].mxu0
        %v900 = vpop.f32.mrb[0].mxu0
        %v901 = vadd.f32 %v773, %v900
        %v902 = vpop.f32.mrb[0].mxu0
        %903 = vmatprep.mubr.bf16.mxu0 0
        %904 = vmatmul.mubr.bf16.gmra.mrb[0].mxu0 %v750
        %v905 = vpop.f32.mrb[0].mxu0
        %v906 = vadd.f32 %v773, %v905
        %v907 = vpop.f32.mrb[0].mxu0
        %v908 = vpop.f32.mrb[0].mxu0
        %v909 = vadd.f32 %v773, %v908
        %v910 = vpop.f32.mrb[0].mxu0
        %911 = vmatprep.mubr.bf16.mxu0 0
        %912 = vmatmul.mubr.bf16.gmra.mrb[0].mxu0 %v751
        %v913 = vpop.f32.mrb[0].mxu0
        %v914 = vadd.f32 %v773, %v913
        %v915 = vpop.f32.mrb[0].mxu0
        %v916 = vpop.f32.mrb[0].mxu0
        %v917 = vadd.f32 %v773, %v916
        %v918 = vpop.f32.mrb[0].mxu0
        %919 = vdwg.mxu0
        %v920 = vtanh.pop %v858
        %v921 = vtanh.pop %v861
        %v922 = vtanh.pop %v866
        %v923 = vtanh.pop %v869
        %v924 = vtanh.pop %v874
        %v925 = vtanh.pop %v877
        %v926 = vtanh.pop %v882
        %v927 = vtanh.pop %v885
        %v928 = vtanh.pop %v890
        %v929 = vtanh.pop %v893
        %v930 = vtanh.pop %v898
        %v931 = vtanh.pop %v901
        %v932 = vtanh.pop %v906
        %v933 = vtanh.pop %v909
        %v934 = vtanh.pop %v914
        %v935 = vtanh.pop %v917
        %936 = vst [vmem:[%s340] sm:$0xff] %v920
        %937 = vst [vmem:[%s340 + $0x8] sm:$0xff] %v921
        %938 = vst [vmem:[%s340 + $0x10] sm:$0xff] %v922
        %939 = vst [vmem:[%s340 + $0x18] sm:$0xff] %v923
        %940 = vst [vmem:[%s340 + $0x20] sm:$0xff] %v924
        %941 = vst [vmem:[%s340 + $0x28] sm:$0xff] %v925
        %942 = vst [vmem:[%s340 + $0x30] sm:$0xff] %v926
        %943 = vst [vmem:[%s340 + $0x38] sm:$0xff] %v927
        %944 = vst [vmem:[%s340 + $0x40] sm:$0xff] %v928
        %945 = vst [vmem:[%s340 + $0x48] sm:$0xff] %v929
        %946 = vst [vmem:[%s340 + $0x50] sm:$0xff] %v930
        %947 = vst [vmem:[%s340 + $0x58] sm:$0xff] %v931
        %948 = vst [vmem:[%s340 + $0x60] sm:$0xff] %v932
        %949 = vst [vmem:[%s340 + $0x68] sm:$0xff] %v933
        %950 = vst [vmem:[%s340 + $0x70] sm:$0xff] %v934
        %951 = vst [vmem:[%s340 + $0x78] sm:$0xff] %v935
        %s952 = sand.u32 %s186, 1
        %s953 = scalar_lea.sflag [#allocation4], %s952
        %s954 = sand.u32 %s186, 1
        %s955 = smul.addr %s954, 128
        %s956 = scalar_lea.vmem [#allocation10], %s955
        // Predicated region
        $region65: #{tpu_custom_call.1} parent=47 // pred_check
          %p957 = pneg %p196
        $region66: #{tpu_custom_call.1} parent=47 // pred_check_branch
          %959 = sbr.rel (%p957) target = $region68
        $region67: #{tpu_custom_call.1} parent=47 // pred_region
          %s960 = smul.u32 16, %s26
          %s962 = ssub.s32 2048, 2048
          %963 = vsyncadd %s953, %s962
          %s964 = smul.addr %s960, 128
          %s965 = scalar_lea.hbm %s7, %s964
          %s966 = sshll.u32 %s956, 4
          %s967 = int_to_ptr.vmem [resolvable:$true] %s966
          %972 = dma.vmem_to_hbm [thread:$0]  %s967, 2048, %s965, %s953, 128, 128, 8
        $region68: #{tpu_custom_call.1} parent=47 // pred_fallthru
          _
      $region48: #{tpu_custom_call.1} parent=5 // pred_fallthru
        _
      %p973 = scmp.le.s32.totalorder 2, %s21
      // Predicated region
      $region69: #{tpu_custom_call.1} parent=5 // pred_check
        %p974 = pneg %p973
      $region70: #{tpu_custom_call.1} parent=5 // pred_check_branch
        %976 = sbr.rel (%p974) target = $region72
      $region71: #{tpu_custom_call.1} parent=5 // pred_region
        %s977 = ssub.s32 %s21, 2
        // Predicated region
        $region73: #{tpu_custom_call.1} parent=71 // pred_check
          %p978 = pneg %p202
        $region74: #{tpu_custom_call.1} parent=71 // pred_check_branch
          %980 = sbr.rel (%p978) target = $region76
        $region75: #{tpu_custom_call.1} parent=71 // pred_region
          %s981 = sand.u32 %s187, 1
          %s982 = scalar_lea.sflag [#allocation4], %s981
          %s983 = sand.u32 %s187, 1
          %s984 = smul.addr %s983, 128
          %s985 = scalar_lea.vmem [#allocation10], %s984
          %986 = dma.done %s982, 2048
        $region76: #{tpu_custom_call.1} parent=71 // pred_fallthru
          _
      $region72: #{tpu_custom_call.1} parent=5 // pred_fallthru
        _
    $region6: #{tpu_custom_call.1} parent=1 // loop_footer
      %s25 = sadd.s32 1, %s21
    $region7: #{tpu_custom_call.1} parent=1 // loop_footer_branch
      %20 = sbr.rel target = $region3
    $region8: #{tpu_custom_call.1} parent=1 // loop_exit
      _
    %987 = vsyncpa [#allocation3], 1
    %s988 = scalar_lea.sflag [#allocation3], 1
    %989 = vsyncpa %s988, 1
    %990 = vsyncpa [#allocation6], 1
    %991 = vsyncpa [#allocation9], 1
    %992 = vsyncpa [#allocation4], 1
    %s993 = scalar_lea.sflag [#allocation4], 1
    %994 = vsyncpa %s993, 1

// kernel: tpu_custom_call.1
$region0: #{tpu_custom_call.1}
  #allocation0 [shape = 'u32[]', space=smem, size = 0x4, offset = 0x4, fixed_abs, tag = 'smem constant byte address 0x4 - core index']
  #allocation1 [shape = 'u32[144,128]{1,0:T(1,128)}', space=vmem, size = 0x12000, scoped, tag = 'internal scratch']
  %s0 = inlined_call_operand.hbm [shape: f32[256,128], index: 0, kind: input, shape index: {}]
  %s1 = inlined_call_operand.hbm [shape: bf16[128,128], index: 1, kind: input, shape index: {}]
  %s2 = inlined_call_operand.vmem [shape: f32[1,128], index: 2, kind: input, shape index: {}]
  %s3 = inlined_call_operand.hbm [shape: bf16[128,128], index: 3, kind: input, shape index: {}]
  %s4 = inlined_call_operand.vmem [shape: f32[1,128], index: 4, kind: input, shape index: {}]
  %s5 = inlined_call_operand.hbm [shape: bf16[128,128], index: 5, kind: input, shape index: {}]
  %s6 = inlined_call_operand.vmem [shape: f32[1,128], index: 6, kind: input, shape index: {}]
  %s7 = inlined_call_operand.hbm [shape: f32[256,128], index: 7, kind: output, shape index: {}]
  %s8 = sld [smem:[#allocation0]]
  $region77: #{tpu_custom_call.1} parent=0
    _
  %s10 = ssub.s32 1, %s8
  %s11 = scalar_select 0, %s10, %s8
  $region1: #{tpu_custom_call.1} parent=0
    #allocation2 [shape = 'u8[131072]{0}', space=vmem, size = 0x20000, scoped, tag = 'input window, operand 0']
    #allocation3 [shape = 's32[2]{0}', space=sflag, size = 0x8, scoped, tag = 'scoped memory for tpu_custom_call.1']
    #allocation4 [shape = 's32[2]{0}', space=sflag, size = 0x8, scoped, tag = 'scoped memory for tpu_custom_call.1']
    #allocation5 [shape = 'u8[32768]{0}', space=vmem, size = 0x8000, scoped, tag = 'input window, operand 1, single buffered']
    #allocation6 [shape = 's32[1]{0}', space=sflag, size = 0x4, scoped, tag = 'scoped memory for tpu_custom_call.1']
    #allocation7 [shape = 'u8[32768]{0}', space=vmem, size = 0x8000, scoped, tag = 'input window, operand 3, single buffered']
    #allocation8 [shape = 'u8[32768]{0}', space=vmem, size = 0x8000, scoped, tag = 'input window, operand 5, single buffered']
    #allocation9 [shape = 's32[1]{0}', space=sflag, size = 0x4, scoped, tag = 'scoped memory for tpu_custom_call.1']
    #allocation10 [shape = 'u8[131072]{0}', space=vmem, size = 0x20000, scoped, tag = 'output window, operand 0']
    %12 = vsyncpa [#allocation3], 0
    %s13 = scalar_lea.sflag [#allocation3], 1
    %14 = vsyncpa %s13, 0
    %15 = vsyncpa [#allocation6], 0
    %16 = vsyncpa [#allocation9], 0
    %17 = vsyncpa [#allocation4], 0
    %s18 = scalar_lea.sflag [#allocation4], 1
    %19 = vsyncpa %s18, 0
    loop: start=0, step=1, limit=4
    $region2: #{tpu_custom_call.1} parent=1 // loop_pre_header
      _
    $region3: #{tpu_custom_call.1} parent=1 // loop_header
      %s21 = sphi 0, %s25
      %p22 = scmp.ge.s32.totalorder %s21, 4
      %s31 = sphi 0, %s33
      %s34 = sphi 0, %s31
      %s35 = sphi 0, %s34
      %s51 = sphi 0, %s35
      %s55 = sphi 0, %s55
      %s57 = sphi 0, %s55
      %s58 = sphi 0, %s57
      %s72 = sphi 0, %s58
      %s76 = sphi 0, %s76
      %s78 = sphi 0, %s76
      %s79 = sphi 0, %s78
      %s93 = sphi 0, %s79
      %s97 = sphi 0, %s97
      %s99 = sphi 0, %s97
      %s100 = sphi 0, %s99
      %s114 = sphi 0, %s100
      %s118 = sphi 0, %s118
      %s120 = sphi 0, %s118
      %s121 = sphi 0, %s120
      %s135 = sphi 0, %s121
      %s139 = sphi 0, %s139
      %s141 = sphi 0, %s139
      %s142 = sphi 0, %s141
      %s156 = sphi 0, %s142
      %s160 = sphi 0, %s160
      %s162 = sphi 0, %s160
      %s163 = sphi 0, %s162
      %s177 = sphi 0, %s163
      %s183 = sphi 0, %s185
      %s186 = sphi 0, %s183
      %s187 = sphi 0, %s186
      %s203 = sphi 0, %s187
    $region4: #{tpu_custom_call.1} parent=1 // loop_header_branch
      %24 = sbr.rel (%p22) target = $region8
    $region5: #{tpu_custom_call.1} parent=1 // loop_body
      %s26 = ssub.s32 %s21, 1
      %s27 = ssub.s32 %s21, 2
      %s28 = sadd.s32 %s21, 1
      %s29 = ssub.s32 %s21, %s28
      %p30 = scmp.eq.s32.totalorder %s29, 0
      %s32 = sadd.s32 %s31, 1
      %s33 = scalar_select %p30, %s31, %s32
      %p36 = pneg %p30
      %p37 = scmp.eq.s32.totalorder %s21, 1
      %p38 = por %p36, %p37
      %p39 = scmp.ne.s32.totalorder %s31, %s34
      %p40 = scmp.eq.s32.totalorder %s21, 0
      %p41 = por %p39, %p40
      %p42 = scmp.ne.s32.totalorder %s31, %s34
      %p43 = scmp.eq.s32.totalorder %s26, 1
      %p44 = por %p42, %p43
      %p45 = scmp.ne.s32.totalorder %s34, %s35
      %p46 = scmp.eq.s32.totalorder %s26, 0
      %p47 = por %p45, %p46
      %p48 = scmp.ne.s32.totalorder %s34, %s35
      %p49 = scmp.eq.s32.totalorder %s27, 1
      %p50 = por %p48, %p49
      %p52 = scmp.ne.s32.totalorder %s35, %s51
      %p53 = scmp.eq.s32.totalorder %s27, 0
      %p54 = por %p52, %p53
      %s56 = sadd.s32 %s55, 1
      %p59 = scmp.eq.s32.totalorder %s21, 1
      %p60 = scmp.ne.s32.totalorder %s55, %s57
      %p61 = scmp.eq.s32.totalorder %s21, 0
      %p62 = por %p60, %p61
      %p63 = scmp.ne.s32.totalorder %s55, %s57
      %p64 = scmp.eq.s32.totalorder %s26, 1
      %p65 = por %p63, %p64
      %p66 = scmp.ne.s32.totalorder %s57, %s58
      %p67 = scmp.eq.s32.totalorder %s26, 0
      %p68 = por %p66, %p67
      %p69 = scmp.ne.s32.totalorder %s57, %s58
      %p70 = scmp.eq.s32.totalorder %s27, 1
      %p71 = por %p69, %p70
      %p73 = scmp.ne.s32.totalorder %s58, %s72
      %p74 = scmp.eq.s32.totalorder %s27, 0
      %p75 = por %p73, %p74
      %s77 = sadd.s32 %s76, 1
      %p80 = scmp.eq.s32.totalorder %s21, 1
      %p81 = scmp.ne.s32.totalorder %s76, %s78
      %p82 = scmp.eq.s32.totalorder %s21, 0
      %p83 = por %p81, %p82
      %p84 = scmp.ne.s32.totalorder %s76, %s78
      %p85 = scmp.eq.s32.totalorder %s26, 1
      %p86 = por %p84, %p85
      %p87 = scmp.ne.s32.totalorder %s78, %s79
      %p88 = scmp.eq.s32.totalorder %s26, 0
      %p89 = por %p87, %p88
      %p90 = scmp.ne.s32.totalorder %s78, %s79
      %p91 = scmp.eq.s32.totalorder %s27, 1
      %p92 = por %p90, %p91
      %p94 = scmp.ne.s32.totalorder %s79, %s93
      %p95 = scmp.eq.s32.totalorder %s27, 0
      %p96 = por %p94, %p95
      %s98 = sadd.s32 %s97, 1
      %p101 = scmp.eq.s32.totalorder %s21, 1
      %p102 = scmp.ne.s32.totalorder %s97, %s99
      %p103 = scmp.eq.s32.totalorder %s21, 0
      %p104 = por %p102, %p103
      %p105 = scmp.ne.s32.totalorder %s97, %s99
      %p106 = scmp.eq.s32.totalorder %s26, 1
      %p107 = por %p105, %p106
      %p108 = scmp.ne.s32.totalorder %s99, %s100
      %p109 = scmp.eq.s32.totalorder %s26, 0
      %p110 = por %p108, %p109
      %p111 = scmp.ne.s32.totalorder %s99, %s100
      %p112 = scmp.eq.s32.totalorder %s27, 1
      %p113 = por %p111, %p112
      %p115 = scmp.ne.s32.totalorder %s100, %s114
      %p116 = scmp.eq.s32.totalorder %s27, 0
      %p117 = por %p115, %p116
      %s119 = sadd.s32 %s118, 1
      %p122 = scmp.eq.s32.totalorder %s21, 1
      %p123 = scmp.ne.s32.totalorder %s118, %s120
      %p124 = scmp.eq.s32.totalorder %s21, 0
      %p125 = por %p123, %p124
      %p126 = scmp.ne.s32.totalorder %s118, %s120
      %p127 = scmp.eq.s32.totalorder %s26, 1
      %p128 = por %p126, %p127
      %p129 = scmp.ne.s32.totalorder %s120, %s121
      %p130 = scmp.eq.s32.totalorder %s26, 0
      %p131 = por %p129, %p130
      %p132 = scmp.ne.s32.totalorder %s120, %s121
      %p133 = scmp.eq.s32.totalorder %s27, 1
      %p134 = por %p132, %p133
      %p136 = scmp.ne.s32.totalorder %s121, %s135
      %p137 = scmp.eq.s32.totalorder %s27, 0
      %p138 = por %p136, %p137
      %s140 = sadd.s32 %s139, 1
      %p143 = scmp.eq.s32.totalorder %s21, 1
      %p144 = scmp.ne.s32.totalorder %s139, %s141
      %p145 = scmp.eq.s32.totalorder %s21, 0
      %p146 = por %p144, %p145
      %p147 = scmp.ne.s32.totalorder %s139, %s141
      %p148 = scmp.eq.s32.totalorder %s26, 1
      %p149 = por %p147, %p148
      %p150 = scmp.ne.s32.totalorder %s141, %s142
      %p151 = scmp.eq.s32.totalorder %s26, 0
      %p152 = por %p150, %p151
      %p153 = scmp.ne.s32.totalorder %s141, %s142
      %p154 = scmp.eq.s32.totalorder %s27, 1
      %p155 = por %p153, %p154
      %p157 = scmp.ne.s32.totalorder %s142, %s156
      %p158 = scmp.eq.s32.totalorder %s27, 0
      %p159 = por %p157, %p158
      %s161 = sadd.s32 %s160, 1
      %p164 = scmp.eq.s32.totalorder %s21, 1
      %p165 = scmp.ne.s32.totalorder %s160, %s162
      %p166 = scmp.eq.s32.totalorder %s21, 0
      %p167 = por %p165, %p166
      %p168 = scmp.ne.s32.totalorder %s160, %s162
      %p169 = scmp.eq.s32.totalorder %s26, 1
      %p170 = por %p168, %p169
      %p171 = scmp.ne.s32.totalorder %s162, %s163
      %p172 = scmp.eq.s32.totalorder %s26, 0
      %p173 = por %p171, %p172
      %p174 = scmp.ne.s32.totalorder %s162, %s163
      %p175 = scmp.eq.s32.totalorder %s27, 1
      %p176 = por %p174, %p175
      %p178 = scmp.ne.s32.totalorder %s163, %s177
      %p179 = scmp.eq.s32.totalorder %s27, 0
      %p180 = por %p178, %p179
      %s181 = ssub.s32 %s21, %s28
      %p182 = scmp.eq.s32.totalorder %s181, 0
      %s184 = sadd.s32 %s183, 1
      %s185 = scalar_select %p182, %s183, %s184
      %p188 = pneg %p182
      %p189 = scmp.eq.s32.totalorder %s21, 1
      %p190 = por %p188, %p189
      %p191 = scmp.ne.s32.totalorder %s183, %s186
      %p192 = scmp.eq.s32.totalorder %s21, 0
      %p193 = por %p191, %p192
      %p194 = scmp.ne.s32.totalorder %s183, %s186
      %p195 = scmp.eq.s32.totalorder %s26, 1
      %p196 = por %p194, %p195
      %p197 = scmp.ne.s32.totalorder %s186, %s187
      %p198 = scmp.eq.s32.totalorder %s26, 0
      %p199 = por %p197, %p198
      %p200 = scmp.ne.s32.totalorder %s186, %s187
      %p201 = scmp.eq.s32.totalorder %s27, 1
      %p202 = por %p200, %p201
      %p204 = scmp.ne.s32.totalorder %s187, %s203
      %p205 = scmp.eq.s32.totalorder %s27, 0
      %p206 = por %p204, %p205
      %p207 = scmp.le.s32.totalorder 1, %s21
      %p208 = scmp.lt.s32.totalorder %s21, 3
      %p209 = pnand %p207, %p208
      %p210 = pneg %p209
      // Predicated region
      $region9: #{tpu_custom_call.1} parent=5 // pred_check
        _
      $region10: #{tpu_custom_call.1} parent=5 // pred_check_branch
        %212 = sbr.rel (%p209) target = $region12
      $region11: #{tpu_custom_call.1} parent=5 // pred_region
        %s213 = ssub.s32 %s21, 1
        // Predicated region
        $region13: #{tpu_custom_call.1} parent=11 // pred_check
          %p214 = pneg %p68
        $region14: #{tpu_custom_call.1} parent=11 // pred_check_branch
          %216 = sbr.rel (%p214) target = $region16
        $region15: #{tpu_custom_call.1} parent=11 // pred_region
          %s218 = ssub.s32 1024, 1024
          %219 = vsyncadd [#allocation6], %s218
          %s220 = sshll.u32 [#allocation5], 4
          %s221 = int_to_ptr.vmem [resolvable:$true] %s220
          %226 = dma.hbm_to_vmem [thread:$0]  %s1, 1024, %s221, [#allocation6], 64, 64, 4
        $region16: #{tpu_custom_call.1} parent=11 // pred_fallthru
          _
        // Predicated region
        $region17: #{tpu_custom_call.1} parent=11 // pred_check
          %p227 = pneg %p89
        $region18: #{tpu_custom_call.1} parent=11 // pred_check_branch
          %229 = sbr.rel (%p227) target = $region20
        $region19: #{tpu_custom_call.1} parent=11 // pred_region
          _
        $region20: #{tpu_custom_call.1} parent=11 // pred_fallthru
          _
        // Predicated region
        $region21: #{tpu_custom_call.1} parent=11 // pred_check
          %p230 = pneg %p110
        $region22: #{tpu_custom_call.1} parent=11 // pred_check_branch
          %232 = sbr.rel (%p230) target = $region24
        $region23: #{tpu_custom_call.1} parent=11 // pred_region
          %s234 = ssub.s32 1024, 1024
          %235 = vsyncadd [#allocation6], %s234
          %s236 = sshll.u32 [#allocation7], 4
          %s237 = int_to_ptr.vmem [resolvable:$true] %s236
          %242 = dma.hbm_to_vmem [thread:$0]  %s3, 1024, %s237, [#allocation6], 64, 64, 4
        $region24: #{tpu_custom_call.1} parent=11 // pred_fallthru
          _
        // Predicated region
        $region25: #{tpu_custom_call.1} parent=11 // pred_check
          %p243 = pneg %p131
        $region26: #{tpu_custom_call.1} parent=11 // pred_check_branch
          %245 = sbr.rel (%p243) target = $region28
        $region27: #{tpu_custom_call.1} parent=11 // pred_region
          _
        $region28: #{tpu_custom_call.1} parent=11 // pred_fallthru
          _
        // Predicated region
        $region29: #{tpu_custom_call.1} parent=11 // pred_check
          %p246 = pneg %p152
        $region30: #{tpu_custom_call.1} parent=11 // pred_check_branch
          %248 = sbr.rel (%p246) target = $region32
        $region31: #{tpu_custom_call.1} parent=11 // pred_region
          %s250 = ssub.s32 1024, 1024
          %251 = vsyncadd [#allocation9], %s250
          %s252 = sshll.u32 [#allocation8], 4
          %s253 = int_to_ptr.vmem [resolvable:$true] %s252
          %258 = dma.hbm_to_vmem [thread:$0]  %s5, 1024, %s253, [#allocation9], 64, 64, 4
        $region32: #{tpu_custom_call.1} parent=11 // pred_fallthru
          _
        // Predicated region
        $region33: #{tpu_custom_call.1} parent=11 // pred_check
          %p259 = pneg %p173
        $region34: #{tpu_custom_call.1} parent=11 // pred_check_branch
          %261 = sbr.rel (%p259) target = $region36
        $region35: #{tpu_custom_call.1} parent=11 // pred_region
          _
        $region36: #{tpu_custom_call.1} parent=11 // pred_fallthru
          _
      $region12: #{tpu_custom_call.1} parent=5 // pred_fallthru
        _
      %p262 = scmp.lt.s32.totalorder %s21, 2
      // Predicated region
      $region37: #{tpu_custom_call.1} parent=5 // pred_check
        %p263 = pneg %p262
      $region38: #{tpu_custom_call.1} parent=5 // pred_check_branch
        %265 = sbr.rel (%p263) target = $region40
      $region39: #{tpu_custom_call.1} parent=5 // pred_region
        // Predicated region
        $region41: #{tpu_custom_call.1} parent=39 // pred_check
          %p266 = pneg %p41
        $region42: #{tpu_custom_call.1} parent=39 // pred_check_branch
          %268 = sbr.rel (%p266) target = $region44
        $region43: #{tpu_custom_call.1} parent=39 // pred_region
          %s269 = sand.u32 %s31, 1
          %s270 = scalar_lea.sflag [#allocation3], %s269
          %s271 = sand.u32 %s31, 1
          %s272 = smul.addr %s271, 128
          %s273 = scalar_lea.vmem [#allocation2], %s272
          %s274 = smul.u32 16, %s21
          %s276 = ssub.s32 2048, 2048
          %277 = vsyncadd %s270, %s276
          %s278 = smul.addr %s274, 128
          %s279 = scalar_lea.hbm %s0, %s278
          %s280 = sshll.u32 %s273, 4
          %s281 = int_to_ptr.vmem [resolvable:$true] %s280
          %286 = dma.hbm_to_vmem [thread:$0]  %s279, 2048, %s281, %s270, 128, 128, 8
        $region44: #{tpu_custom_call.1} parent=39 // pred_fallthru
          _
      $region40: #{tpu_custom_call.1} parent=5 // pred_fallthru
        _
      %p287 = scmp.le.s32.totalorder 1, %s21
      %p288 = scmp.lt.s32.totalorder %s21, 3
      %p289 = pnand %p287, %p288
      %p290 = pneg %p289
      // Predicated region
      $region45: #{tpu_custom_call.1} parent=5 // pred_check
        _
      $region46: #{tpu_custom_call.1} parent=5 // pred_check_branch
        %292 = sbr.rel (%p289) target = $region48
      $region47: #{tpu_custom_call.1} parent=5 // pred_region
        %s293 = ssub.s32 %s21, 1
        %s294 = sand.u32 %s34, 1
        %s295 = scalar_lea.sflag [#allocation3], %s294
        %s296 = sand.u32 %s34, 1
        %s297 = smul.addr %s296, 128
        %s298 = scalar_lea.vmem [#allocation2], %s297
        // Predicated region
        $region49: #{tpu_custom_call.1} parent=47 // pred_check
          %p299 = pneg %p47
        $region50: #{tpu_custom_call.1} parent=47 // pred_check_branch
          %301 = sbr.rel (%p299) target = $region52
        $region51: #{tpu_custom_call.1} parent=47 // pred_region
          %302 = dma.done %s295, 2048
        $region52: #{tpu_custom_call.1} parent=47 // pred_fallthru
          _
        // Predicated region
        $region53: #{tpu_custom_call.1} parent=47 // pred_check
          %p303 = pneg %p68
        $region54: #{tpu_custom_call.1} parent=47 // pred_check_branch
          %305 = sbr.rel (%p303) target = $region56
        $region55: #{tpu_custom_call.1} parent=47 // pred_region
          %306 = dma.done [#allocation6], 1024
        $region56: #{tpu_custom_call.1} parent=47 // pred_fallthru
          _
        // Predicated region
        $region57: #{tpu_custom_call.1} parent=47 // pred_check
          %p307 = pneg %p110
        $region58: #{tpu_custom_call.1} parent=47 // pred_check_branch
          %309 = sbr.rel (%p307) target = $region60
        $region59: #{tpu_custom_call.1} parent=47 // pred_region
          %310 = dma.done [#allocation6], 1024
        $region60: #{tpu_custom_call.1} parent=47 // pred_fallthru
          _
        // Predicated region
        $region61: #{tpu_custom_call.1} parent=47 // pred_check
          %p311 = pneg %p152
        $region62: #{tpu_custom_call.1} parent=47 // pred_check_branch
          %313 = sbr.rel (%p311) target = $region64
        $region63: #{tpu_custom_call.1} parent=47 // pred_region
          %314 = dma.done [#allocation9], 1024
        $region64: #{tpu_custom_call.1} parent=47 // pred_fallthru
          _
        %s315 = sand.u32 %s34, 1
        %s316 = scalar_lea.sflag [#allocation3], %s315
        %s317 = sand.u32 %s34, 1
        %s318 = smul.addr %s317, 128
        %s319 = scalar_lea.vmem [#allocation2], %s318
        %p320 = pneg %p47
        %p321 = pneg %p44
        %p322 = pneg %p68
        %p323 = pneg %p65
        %p324 = pneg %p89
        %p325 = pneg %p86
        %p326 = pneg %p110
        %p327 = pneg %p107
        %p328 = pneg %p131
        %p329 = pneg %p128
        %p330 = pneg %p152
        %p331 = pneg %p149
        %p332 = pneg %p173
        %p333 = pneg %p170
        %p334 = pneg %p199
        %p335 = pneg %p196
        %s336 = sand.u32 %s186, 1
        %s337 = scalar_lea.sflag [#allocation4], %s336
        %s338 = sand.u32 %s186, 1
        %s339 = smul.addr %s338, 128
        %s340 = scalar_lea.vmem [#allocation10], %s339
        %s341 = smul.u32 16, %s26
        %s342 = smul.u32 16, %s26
        %v344 = vld [vmem:[%s298] sm:$0xff]
        %v345 = vld [vmem:[%s298 + $0x8] sm:$0xff]
        %v346 = vld [vmem:[%s298 + $0x10] sm:$0xff]
        %v347 = vld [vmem:[%s298 + $0x18] sm:$0xff]
        %v348 = vld [vmem:[%s298 + $0x20] sm:$0xff]
        %v349 = vld [vmem:[%s298 + $0x28] sm:$0xff]
        %v350 = vld [vmem:[%s298 + $0x30] sm:$0xff]
        %v351 = vld [vmem:[%s298 + $0x38] sm:$0xff]
        %v352 = vld [vmem:[%s298 + $0x40] sm:$0xff]
        %v353 = vld [vmem:[%s298 + $0x48] sm:$0xff]
        %v354 = vld [vmem:[%s298 + $0x50] sm:$0xff]
        %v355 = vld [vmem:[%s298 + $0x58] sm:$0xff]
        %v356 = vld [vmem:[%s298 + $0x60] sm:$0xff]
        %v357 = vld [vmem:[%s298 + $0x68] sm:$0xff]
        %v358 = vld [vmem:[%s298 + $0x70] sm:$0xff]
        %v359 = vld [vmem:[%s298 + $0x78] sm:$0xff]
        %v360 = vpack.c.bf16 %v345, %v344
        %v361 = vpack.c.bf16 %v347, %v346
        %v362 = vpack.c.bf16 %v349, %v348
        %v363 = vpack.c.bf16 %v351, %v350
        %v364 = vpack.c.bf16 %v353, %v352
        %v365 = vpack.c.bf16 %v355, %v354
        %v366 = vpack.c.bf16 %v357, %v356
        %v367 = vpack.c.bf16 %v359, %v358
        %v368 = vld [vmem:[#allocation5] sm:$0xf]
        %v369 = vld [vmem:[#allocation5 + $0x4] sm:$0xf]
        %v370 = vld [vmem:[#allocation5 + $0x8] sm:$0xf]
        %v371 = vld [vmem:[#allocation5 + $0xc] sm:$0xf]
        %v372 = vld [vmem:[#allocation5 + $0x10] sm:$0xf]
        %v373 = vld [vmem:[#allocation5 + $0x14] sm:$0xf]
        %v374 = vld [vmem:[#allocation5 + $0x18] sm:$0xf]
        %v375 = vld [vmem:[#allocation5 + $0x1c] sm:$0xf]
        %v376 = vld [vmem:[#allocation5 + $0x20] sm:$0xf]
        %v377 = vld [vmem:[#allocation5 + $0x24] sm:$0xf]
        %v378 = vld [vmem:[#allocation5 + $0x28] sm:$0xf]
        %v379 = vld [vmem:[#allocation5 + $0x2c] sm:$0xf]
        %v380 = vld [vmem:[#allocation5 + $0x30] sm:$0xf]
        %v381 = vld [vmem:[#allocation5 + $0x34] sm:$0xf]
        %v382 = vld [vmem:[#allocation5 + $0x38] sm:$0xf]
        %v383 = vld [vmem:[#allocation5 + $0x3c] sm:$0xf]
        %v384 = vld [vmem:[%s2] sm:$0x1]
        %v386 = vlaneseq
        %v387 = vshrl.u32 %v386, 7
        %v388 = vsub.s32 0, %v387
        %v389 = vrot.slane %v384, %v388
        %v407 = vunpack.c.l.b16 %v368
        %v408 = vunpack.c.l.b16 %v369
        %v409 = vunpack.c.l.b16 %v370
        %v410 = vunpack.c.l.b16 %v371
        %v411 = vunpack.c.l.b16 %v372
        %v412 = vunpack.c.l.b16 %v373
        %v413 = vunpack.c.l.b16 %v374
        %v414 = vunpack.c.l.b16 %v375
        %v415 = vunpack.c.l.b16 %v376
        %v416 = vunpack.c.l.b16 %v377
        %v417 = vunpack.c.l.b16 %v378
        %v418 = vunpack.c.l.b16 %v379
        %v419 = vunpack.c.l.b16 %v380
        %v420 = vunpack.c.l.b16 %v381
        %v421 = vunpack.c.l.b16 %v382
        %v422 = vunpack.c.l.b16 %v383
        %v423 = vpack.c.b16 %v408, %v407
        %v424 = vpack.c.b16 %v410, %v409
        %v425 = vpack.c.b16 %v412, %v411
        %v426 = vpack.c.b16 %v414, %v413
        %v427 = vpack.c.b16 %v416, %v415
        %v428 = vpack.c.b16 %v418, %v417
        %v429 = vpack.c.b16 %v420, %v419
        %v430 = vpack.c.b16 %v422, %v421
        %439 = vmatprep.subr.bf16.mxu0 0
        %440 = vmatpush1.bf16.msra.mxu0 %v423
        %441 = vmatprep.subr.bf16.mxu0 0
        %442 = vmatpush1.bf16.msra.mxu0 %v424
        %443 = vmatprep.subr.bf16.mxu0 0
        %444 = vmatpush1.bf16.msra.mxu0 %v425
        %445 = vmatprep.subr.bf16.mxu0 0
        %446 = vmatpush1.bf16.msra.mxu0 %v426
        %447 = vmatprep.subr.bf16.mxu0 0
        %448 = vmatpush1.bf16.msra.mxu0 %v427
        %449 = vmatprep.subr.bf16.mxu0 0
        %450 = vmatpush1.bf16.msra.mxu0 %v428
        %451 = vmatprep.subr.bf16.mxu0 0
        %452 = vmatpush1.bf16.msra.mxu0 %v429
        %453 = vmatprep.subr.bf16.mxu0 0
        %454 = vmatpush1.bf16.msra.mxu0 %v430
        %455 = vmatprep.subr.bf16.mxu0 0
        %456 = vmatpush1.bf16.msra.mxu0 0
        %457 = vmatprep.subr.bf16.mxu0 0
        %458 = vmatpush1.bf16.msra.mxu0 0
        %459 = vmatprep.subr.bf16.mxu0 0
        %460 = vmatpush1.bf16.msra.mxu0 0
        %461 = vmatprep.subr.bf16.mxu0 0
        %462 = vmatpush1.bf16.msra.mxu0 0
        %463 = vmatprep.subr.bf16.mxu0 0
        %464 = vmatpush1.bf16.msra.mxu0 0
        %465 = vmatprep.subr.bf16.mxu0 0
        %466 = vmatpush1.bf16.msra.mxu0 0
        %467 = vmatprep.subr.bf16.mxu0 0
        %468 = vmatpush1.bf16.msra.mxu0 0
        %469 = vmatprep.subr.bf16.mxu0 0
        %470 = vmatpush1.bf16.msra.mxu0 0
        %471 = vmatprep.mubr.bf16.mxu0 0
        %472 = vmatmul.mubr.bf16.gmra.mrb[0].mxu0 %v360
        %v473 = vpop.f32.mrb[0].mxu0
        %v474 = vadd.f32 %v389, %v473
        %v475 = vpop.f32.mrb[0].mxu0
        %v476 = vpop.f32.mrb[0].mxu0
        %v477 = vadd.f32 %v389, %v476
        %v478 = vpop.f32.mrb[0].mxu0
        %479 = vmatprep.mubr.bf16.mxu0 0
        %480 = vmatmul.mubr.bf16.gmra.mrb[0].mxu0 %v361
        %v481 = vpop.f32.mrb[0].mxu0
        %v482 = vadd.f32 %v389, %v481
        %v483 = vpop.f32.mrb[0].mxu0
        %v484 = vpop.f32.mrb[0].mxu0
        %v485 = vadd.f32 %v389, %v484
        %v486 = vpop.f32.mrb[0].mxu0
        %487 = vmatprep.mubr.bf16.mxu0 0
        %488 = vmatmul.mubr.bf16.gmra.mrb[0].mxu0 %v362
        %v489 = vpop.f32.mrb[0].mxu0
        %v490 = vadd.f32 %v389, %v489
        %v491 = vpop.f32.mrb[0].mxu0
        %v492 = vpop.f32.mrb[0].mxu0
        %v493 = vadd.f32 %v389, %v492
        %v494 = vpop.f32.mrb[0].mxu0
        %495 = vmatprep.mubr.bf16.mxu0 0
        %496 = vmatmul.mubr.bf16.gmra.mrb[0].mxu0 %v363
        %v497 = vpop.f32.mrb[0].mxu0
        %v498 = vadd.f32 %v389, %v497
        %v499 = vpop.f32.mrb[0].mxu0
        %v500 = vpop.f32.mrb[0].mxu0
        %v501 = vadd.f32 %v389, %v500
        %v502 = vpop.f32.mrb[0].mxu0
        %503 = vmatprep.mubr.bf16.mxu0 0
        %504 = vmatmul.mubr.bf16.gmra.mrb[0].mxu0 %v364
        %v505 = vpop.f32.mrb[0].mxu0
        %v506 = vadd.f32 %v389, %v505
        %v507 = vpop.f32.mrb[0].mxu0
        %v508 = vpop.f32.mrb[0].mxu0
        %v509 = vadd.f32 %v389, %v508
        %v510 = vpop.f32.mrb[0].mxu0
        %511 = vmatprep.mubr.bf16.mxu0 0
        %512 = vmatmul.mubr.bf16.gmra.mrb[0].mxu0 %v365
        %v513 = vpop.f32.mrb[0].mxu0
        %v514 = vadd.f32 %v389, %v513
        %v515 = vpop.f32.mrb[0].mxu0
        %v516 = vpop.f32.mrb[0].mxu0
        %v517 = vadd.f32 %v389, %v516
        %v518 = vpop.f32.mrb[0].mxu0
        %519 = vmatprep.mubr.bf16.mxu0 0
        %520 = vmatmul.mubr.bf16.gmra.mrb[0].mxu0 %v366
        %v521 = vpop.f32.mrb[0].mxu0
        %v522 = vadd.f32 %v389, %v521
        %v523 = vpop.f32.mrb[0].mxu0
        %v524 = vpop.f32.mrb[0].mxu0
        %v525 = vadd.f32 %v389, %v524
        %v526 = vpop.f32.mrb[0].mxu0
        %527 = vmatprep.mubr.bf16.mxu0 0
        %528 = vmatmul.mubr.bf16.gmra.mrb[0].mxu0 %v367
        %v529 = vpop.f32.mrb[0].mxu0
        %v530 = vadd.f32 %v389, %v529
        %v531 = vpop.f32.mrb[0].mxu0
        %v532 = vpop.f32.mrb[0].mxu0
        %v533 = vadd.f32 %v389, %v532
        %v534 = vpop.f32.mrb[0].mxu0
        %535 = vdwg.mxu0
        %v536 = vtanh.pop %v474
        %v537 = vtanh.pop %v477
        %v538 = vtanh.pop %v482
        %v539 = vtanh.pop %v485
        %v540 = vtanh.pop %v490
        %v541 = vtanh.pop %v493
        %v542 = vtanh.pop %v498
        %v543 = vtanh.pop %v501
        %v544 = vtanh.pop %v506
        %v545 = vtanh.pop %v509
        %v546 = vtanh.pop %v514
        %v547 = vtanh.pop %v517
        %v548 = vtanh.pop %v522
        %v549 = vtanh.pop %v525
        %v550 = vtanh.pop %v530
        %v551 = vtanh.pop %v533
        %v552 = vpack.c.bf16 %v537, %v536
        %v553 = vpack.c.bf16 %v539, %v538
        %v554 = vpack.c.bf16 %v541, %v540
        %v555 = vpack.c.bf16 %v543, %v542
        %v556 = vpack.c.bf16 %v545, %v544
        %v557 = vpack.c.bf16 %v547, %v546
        %v558 = vpack.c.bf16 %v549, %v548
        %v559 = vpack.c.bf16 %v551, %v550
        %v560 = vld [vmem:[#allocation7] sm:$0xf]
        %v561 = vld [vmem:[#allocation7 + $0x4] sm:$0xf]
        %v562 = vld [vmem:[#allocation7 + $0x8] sm:$0xf]
        %v563 = vld [vmem:[#allocation7 + $0xc] sm:$0xf]
        %v564 = vld [vmem:[#allocation7 + $0x10] sm:$0xf]
        %v565 = vld [vmem:[#allocation7 + $0x14] sm:$0xf]
        %v566 = vld [vmem:[#allocation7 + $0x18] sm:$0xf]
        %v567 = vld [vmem:[#allocation7 + $0x1c] sm:$0xf]
        %v568 = vld [vmem:[#allocation7 + $0x20] sm:$0xf]
        %v569 = vld [vmem:[#allocation7 + $0x24] sm:$0xf]
        %v570 = vld [vmem:[#allocation7 + $0x28] sm:$0xf]
        %v571 = vld [vmem:[#allocation7 + $0x2c] sm:$0xf]
        %v572 = vld [vmem:[#allocation7 + $0x30] sm:$0xf]
        %v573 = vld [vmem:[#allocation7 + $0x34] sm:$0xf]
        %v574 = vld [vmem:[#allocation7 + $0x38] sm:$0xf]
        %v575 = vld [vmem:[#allocation7 + $0x3c] sm:$0xf]
        %v576 = vld [vmem:[%s4] sm:$0x1]
        %v578 = vlaneseq
        %v579 = vshrl.u32 %v578, 7
        %v580 = vsub.s32 0, %v579
        %v581 = vrot.slane %v576, %v580
        %v599 = vunpack.c.l.b16 %v560
        %v600 = vunpack.c.l.b16 %v561
        %v601 = vunpack.c.l.b16 %v562
        %v602 = vunpack.c.l.b16 %v563
        %v603 = vunpack.c.l.b16 %v564
        %v604 = vunpack.c.l.b16 %v565
        %v605 = vunpack.c.l.b16 %v566
        %v606 = vunpack.c.l.b16 %v567
        %v607 = vunpack.c.l.b16 %v568
        %v608 = vunpack.c.l.b16 %v569
        %v609 = vunpack.c.l.b16 %v570
        %v610 = vunpack.c.l.b16 %v571
        %v611 = vunpack.c.l.b16 %v572
        %v612 = vunpack.c.l.b16 %v573
        %v613 = vunpack.c.l.b16 %v574
        %v614 = vunpack.c.l.b16 %v575
        %v615 = vpack.c.b16 %v600, %v599
        %v616 = vpack.c.b16 %v602, %v601
        %v617 = vpack.c.b16 %v604, %v603
        %v618 = vpack.c.b16 %v606, %v605
        %v619 = vpack.c.b16 %v608, %v607
        %v620 = vpack.c.b16 %v610, %v609
        %v621 = vpack.c.b16 %v612, %v611
        %v622 = vpack.c.b16 %v614, %v613
        %631 = vmatprep.subr.bf16.mxu0 0
        %632 = vmatpush1.bf16.msra.mxu0 %v615
        %633 = vmatprep.subr.bf16.mxu0 0
        %634 = vmatpush1.bf16.msra.mxu0 %v616
        %635 = vmatprep.subr.bf16.mxu0 0
        %636 = vmatpush1.bf16.msra.mxu0 %v617
        %637 = vmatprep.subr.bf16.mxu0 0
        %638 = vmatpush1.bf16.msra.mxu0 %v618
        %639 = vmatprep.subr.bf16.mxu0 0
        %640 = vmatpush1.bf16.msra.mxu0 %v619
        %641 = vmatprep.subr.bf16.mxu0 0
        %642 = vmatpush1.bf16.msra.mxu0 %v620
        %643 = vmatprep.subr.bf16.mxu0 0
        %644 = vmatpush1.bf16.msra.mxu0 %v621
        %645 = vmatprep.subr.bf16.mxu0 0
        %646 = vmatpush1.bf16.msra.mxu0 %v622
        %647 = vmatprep.subr.bf16.mxu0 0
        %648 = vmatpush1.bf16.msra.mxu0 0
        %649 = vmatprep.subr.bf16.mxu0 0
        %650 = vmatpush1.bf16.msra.mxu0 0
        %651 = vmatprep.subr.bf16.mxu0 0
        %652 = vmatpush1.bf16.msra.mxu0 0
        %653 = vmatprep.subr.bf16.mxu0 0
        %654 = vmatpush1.bf16.msra.mxu0 0
        %655 = vmatprep.subr.bf16.mxu0 0
        %656 = vmatpush1.bf16.msra.mxu0 0
        %657 = vmatprep.subr.bf16.mxu0 0
        %658 = vmatpush1.bf16.msra.mxu0 0
        %659 = vmatprep.subr.bf16.mxu0 0
        %660 = vmatpush1.bf16.msra.mxu0 0
        %661 = vmatprep.subr.bf16.mxu0 0
        %662 = vmatpush1.bf16.msra.mxu0 0
        %663 = vmatprep.mubr.bf16.mxu0 0
        %664 = vmatmul.mubr.bf16.gmra.mrb[0].mxu0 %v552
        %v665 = vpop.f32.mrb[0].mxu0
        %v666 = vadd.f32 %v581, %v665
        %v667 = vpop.f32.mrb[0].mxu0
        %v668 = vpop.f32.mrb[0].mxu0
        %v669 = vadd.f32 %v581, %v668
        %v670 = vpop.f32.mrb[0].mxu0
        %671 = vmatprep.mubr.bf16.mxu0 0
        %672 = vmatmul.mubr.bf16.gmra.mrb[0].mxu0 %v553
        %v673 = vpop.f32.mrb[0].mxu0
        %v674 = vadd.f32 %v581, %v673
        %v675 = vpop.f32.mrb[0].mxu0
        %v676 = vpop.f32.mrb[0].mxu0
        %v677 = vadd.f32 %v581, %v676
        %v678 = vpop.f32.mrb[0].mxu0
        %679 = vmatprep.mubr.bf16.mxu0 0
        %680 = vmatmul.mubr.bf16.gmra.mrb[0].mxu0 %v554
        %v681 = vpop.f32.mrb[0].mxu0
        %v682 = vadd.f32 %v581, %v681
        %v683 = vpop.f32.mrb[0].mxu0
        %v684 = vpop.f32.mrb[0].mxu0
        %v685 = vadd.f32 %v581, %v684
        %v686 = vpop.f32.mrb[0].mxu0
        %687 = vmatprep.mubr.bf16.mxu0 0
        %688 = vmatmul.mubr.bf16.gmra.mrb[0].mxu0 %v555
        %v689 = vpop.f32.mrb[0].mxu0
        %v690 = vadd.f32 %v581, %v689
        %v691 = vpop.f32.mrb[0].mxu0
        %v692 = vpop.f32.mrb[0].mxu0
        %v693 = vadd.f32 %v581, %v692
        %v694 = vpop.f32.mrb[0].mxu0
        %695 = vmatprep.mubr.bf16.mxu0 0
        %696 = vmatmul.mubr.bf16.gmra.mrb[0].mxu0 %v556
        %v697 = vpop.f32.mrb[0].mxu0
        %v698 = vadd.f32 %v581, %v697
        %v699 = vpop.f32.mrb[0].mxu0
        %v700 = vpop.f32.mrb[0].mxu0
        %v701 = vadd.f32 %v581, %v700
        %v702 = vpop.f32.mrb[0].mxu0
        %703 = vmatprep.mubr.bf16.mxu0 0
        %704 = vmatmul.mubr.bf16.gmra.mrb[0].mxu0 %v557
        %v705 = vpop.f32.mrb[0].mxu0
        %v706 = vadd.f32 %v581, %v705
        %v707 = vpop.f32.mrb[0].mxu0
        %v708 = vpop.f32.mrb[0].mxu0
        %v709 = vadd.f32 %v581, %v708
        %v710 = vpop.f32.mrb[0].mxu0
        %711 = vmatprep.mubr.bf16.mxu0 0
        %712 = vmatmul.mubr.bf16.gmra.mrb[0].mxu0 %v558
        %v713 = vpop.f32.mrb[0].mxu0
        %v714 = vadd.f32 %v581, %v713
        %v715 = vpop.f32.mrb[0].mxu0
        %v716 = vpop.f32.mrb[0].mxu0
        %v717 = vadd.f32 %v581, %v716
        %v718 = vpop.f32.mrb[0].mxu0
        %719 = vmatprep.mubr.bf16.mxu0 0
        %720 = vmatmul.mubr.bf16.gmra.mrb[0].mxu0 %v559
        %v721 = vpop.f32.mrb[0].mxu0
        %v722 = vadd.f32 %v581, %v721
        %v723 = vpop.f32.mrb[0].mxu0
        %v724 = vpop.f32.mrb[0].mxu0
        %v725 = vadd.f32 %v581, %v724
        %v726 = vpop.f32.mrb[0].mxu0
        %727 = vdwg.mxu0
        %v728 = vtanh.pop %v666
        %v729 = vtanh.pop %v669
        %v730 = vtanh.pop %v674
        %v731 = vtanh.pop %v677
        %v732 = vtanh.pop %v682
        %v733 = vtanh.pop %v685
        %v734 = vtanh.pop %v690
        %v735 = vtanh.pop %v693
        %v736 = vtanh.pop %v698
        %v737 = vtanh.pop %v701
        %v738 = vtanh.pop %v706
        %v739 = vtanh.pop %v709
        %v740 = vtanh.pop %v714
        %v741 = vtanh.pop %v717
        %v742 = vtanh.pop %v722
        %v743 = vtanh.pop %v725
        %v744 = vpack.c.bf16 %v729, %v728
        %v745 = vpack.c.bf16 %v731, %v730
        %v746 = vpack.c.bf16 %v733, %v732
        %v747 = vpack.c.bf16 %v735, %v734
        %v748 = vpack.c.bf16 %v737, %v736
        %v749 = vpack.c.bf16 %v739, %v738
        %v750 = vpack.c.bf16 %v741, %v740
        %v751 = vpack.c.bf16 %v743, %v742
        %v752 = vld [vmem:[#allocation8] sm:$0xf]
        %v753 = vld [vmem:[#allocation8 + $0x4] sm:$0xf]
        %v754 = vld [vmem:[#allocation8 + $0x8] sm:$0xf]
        %v755 = vld [vmem:[#allocation8 + $0xc] sm:$0xf]
        %v756 = vld [vmem:[#allocation8 + $0x10] sm:$0xf]
        %v757 = vld [vmem:[#allocation8 + $0x14] sm:$0xf]
        %v758 = vld [vmem:[#allocation8 + $0x18] sm:$0xf]
        %v759 = vld [vmem:[#allocation8 + $0x1c] sm:$0xf]
        %v760 = vld [vmem:[#allocation8 + $0x20] sm:$0xf]
        %v761 = vld [vmem:[#allocation8 + $0x24] sm:$0xf]
        %v762 = vld [vmem:[#allocation8 + $0x28] sm:$0xf]
        %v763 = vld [vmem:[#allocation8 + $0x2c] sm:$0xf]
        %v764 = vld [vmem:[#allocation8 + $0x30] sm:$0xf]
        %v765 = vld [vmem:[#allocation8 + $0x34] sm:$0xf]
        %v766 = vld [vmem:[#allocation8 + $0x38] sm:$0xf]
        %v767 = vld [vmem:[#allocation8 + $0x3c] sm:$0xf]
        %v768 = vld [vmem:[%s6] sm:$0x1]
        %v770 = vlaneseq
        %v771 = vshrl.u32 %v770, 7
        %v772 = vsub.s32 0, %v771
        %v773 = vrot.slane %v768, %v772
        %v791 = vunpack.c.l.b16 %v752
        %v792 = vunpack.c.l.b16 %v753
        %v793 = vunpack.c.l.b16 %v754
        %v794 = vunpack.c.l.b16 %v755
        %v795 = vunpack.c.l.b16 %v756
        %v796 = vunpack.c.l.b16 %v757
        %v797 = vunpack.c.l.b16 %v758
        %v798 = vunpack.c.l.b16 %v759
        %v799 = vunpack.c.l.b16 %v760
        %v800 = vunpack.c.l.b16 %v761
        %v801 = vunpack.c.l.b16 %v762
        %v802 = vunpack.c.l.b16 %v763
        %v803 = vunpack.c.l.b16 %v764
        %v804 = vunpack.c.l.b16 %v765
        %v805 = vunpack.c.l.b16 %v766
        %v806 = vunpack.c.l.b16 %v767
        %v807 = vpack.c.b16 %v792, %v791
        %v808 = vpack.c.b16 %v794, %v793
        %v809 = vpack.c.b16 %v796, %v795
        %v810 = vpack.c.b16 %v798, %v797
        %v811 = vpack.c.b16 %v800, %v799
        %v812 = vpack.c.b16 %v802, %v801
        %v813 = vpack.c.b16 %v804, %v803
        %v814 = vpack.c.b16 %v806, %v805
        %823 = vmatprep.subr.bf16.mxu0 0
        %824 = vmatpush1.bf16.msra.mxu0 %v807
        %825 = vmatprep.subr.bf16.mxu0 0
        %826 = vmatpush1.bf16.msra.mxu0 %v808
        %827 = vmatprep.subr.bf16.mxu0 0
        %828 = vmatpush1.bf16.msra.mxu0 %v809
        %829 = vmatprep.subr.bf16.mxu0 0
        %830 = vmatpush1.bf16.msra.mxu0 %v810
        %831 = vmatprep.subr.bf16.mxu0 0
        %832 = vmatpush1.bf16.msra.mxu0 %v811
        %833 = vmatprep.subr.bf16.mxu0 0
        %834 = vmatpush1.bf16.msra.mxu0 %v812
        %835 = vmatprep.subr.bf16.mxu0 0
        %836 = vmatpush1.bf16.msra.mxu0 %v813
        %837 = vmatprep.subr.bf16.mxu0 0
        %838 = vmatpush1.bf16.msra.mxu0 %v814
        %839 = vmatprep.subr.bf16.mxu0 0
        %840 = vmatpush1.bf16.msra.mxu0 0
        %841 = vmatprep.subr.bf16.mxu0 0
        %842 = vmatpush1.bf16.msra.mxu0 0
        %843 = vmatprep.subr.bf16.mxu0 0
        %844 = vmatpush1.bf16.msra.mxu0 0
        %845 = vmatprep.subr.bf16.mxu0 0
        %846 = vmatpush1.bf16.msra.mxu0 0
        %847 = vmatprep.subr.bf16.mxu0 0
        %848 = vmatpush1.bf16.msra.mxu0 0
        %849 = vmatprep.subr.bf16.mxu0 0
        %850 = vmatpush1.bf16.msra.mxu0 0
        %851 = vmatprep.subr.bf16.mxu0 0
        %852 = vmatpush1.bf16.msra.mxu0 0
        %853 = vmatprep.subr.bf16.mxu0 0
        %854 = vmatpush1.bf16.msra.mxu0 0
        %855 = vmatprep.mubr.bf16.mxu0 0
        %856 = vmatmul.mubr.bf16.gmra.mrb[0].mxu0 %v744
        %v857 = vpop.f32.mrb[0].mxu0
        %v858 = vadd.f32 %v773, %v857
        %v859 = vpop.f32.mrb[0].mxu0
        %v860 = vpop.f32.mrb[0].mxu0
        %v861 = vadd.f32 %v773, %v860
        %v862 = vpop.f32.mrb[0].mxu0
        %863 = vmatprep.mubr.bf16.mxu0 0
        %864 = vmatmul.mubr.bf16.gmra.mrb[0].mxu0 %v745
        %v865 = vpop.f32.mrb[0].mxu0
        %v866 = vadd.f32 %v773, %v865
        %v867 = vpop.f32.mrb[0].mxu0
        %v868 = vpop.f32.mrb[0].mxu0
        %v869 = vadd.f32 %v773, %v868
        %v870 = vpop.f32.mrb[0].mxu0
        %871 = vmatprep.mubr.bf16.mxu0 0
        %872 = vmatmul.mubr.bf16.gmra.mrb[0].mxu0 %v746
        %v873 = vpop.f32.mrb[0].mxu0
        %v874 = vadd.f32 %v773, %v873
        %v875 = vpop.f32.mrb[0].mxu0
        %v876 = vpop.f32.mrb[0].mxu0
        %v877 = vadd.f32 %v773, %v876
        %v878 = vpop.f32.mrb[0].mxu0
        %879 = vmatprep.mubr.bf16.mxu0 0
        %880 = vmatmul.mubr.bf16.gmra.mrb[0].mxu0 %v747
        %v881 = vpop.f32.mrb[0].mxu0
        %v882 = vadd.f32 %v773, %v881
        %v883 = vpop.f32.mrb[0].mxu0
        %v884 = vpop.f32.mrb[0].mxu0
        %v885 = vadd.f32 %v773, %v884
        %v886 = vpop.f32.mrb[0].mxu0
        %887 = vmatprep.mubr.bf16.mxu0 0
        %888 = vmatmul.mubr.bf16.gmra.mrb[0].mxu0 %v748
        %v889 = vpop.f32.mrb[0].mxu0
        %v890 = vadd.f32 %v773, %v889
        %v891 = vpop.f32.mrb[0].mxu0
        %v892 = vpop.f32.mrb[0].mxu0
        %v893 = vadd.f32 %v773, %v892
        %v894 = vpop.f32.mrb[0].mxu0
        %895 = vmatprep.mubr.bf16.mxu0 0
        %896 = vmatmul.mubr.bf16.gmra.mrb[0].mxu0 %v749
        %v897 = vpop.f32.mrb[0].mxu0
        %v898 = vadd.f32 %v773, %v897
        %v899 = vpop.f32.mrb[0].mxu0
        %v900 = vpop.f32.mrb[0].mxu0
        %v901 = vadd.f32 %v773, %v900
        %v902 = vpop.f32.mrb[0].mxu0
        %903 = vmatprep.mubr.bf16.mxu0 0
        %904 = vmatmul.mubr.bf16.gmra.mrb[0].mxu0 %v750
        %v905 = vpop.f32.mrb[0].mxu0
        %v906 = vadd.f32 %v773, %v905
        %v907 = vpop.f32.mrb[0].mxu0
        %v908 = vpop.f32.mrb[0].mxu0
        %v909 = vadd.f32 %v773, %v908
        %v910 = vpop.f32.mrb[0].mxu0
        %911 = vmatprep.mubr.bf16.mxu0 0
        %912 = vmatmul.mubr.bf16.gmra.mrb[0].mxu0 %v751
        %v913 = vpop.f32.mrb[0].mxu0
        %v914 = vadd.f32 %v773, %v913
        %v915 = vpop.f32.mrb[0].mxu0
        %v916 = vpop.f32.mrb[0].mxu0
        %v917 = vadd.f32 %v773, %v916
        %v918 = vpop.f32.mrb[0].mxu0
        %919 = vdwg.mxu0
        %v920 = vtanh.pop %v858
        %v921 = vtanh.pop %v861
        %v922 = vtanh.pop %v866
        %v923 = vtanh.pop %v869
        %v924 = vtanh.pop %v874
        %v925 = vtanh.pop %v877
        %v926 = vtanh.pop %v882
        %v927 = vtanh.pop %v885
        %v928 = vtanh.pop %v890
        %v929 = vtanh.pop %v893
        %v930 = vtanh.pop %v898
        %v931 = vtanh.pop %v901
        %v932 = vtanh.pop %v906
        %v933 = vtanh.pop %v909
        %v934 = vtanh.pop %v914
        %v935 = vtanh.pop %v917
        %936 = vst [vmem:[%s340] sm:$0xff] %v920
        %937 = vst [vmem:[%s340 + $0x8] sm:$0xff] %v921
        %938 = vst [vmem:[%s340 + $0x10] sm:$0xff] %v922
        %939 = vst [vmem:[%s340 + $0x18] sm:$0xff] %v923
        %940 = vst [vmem:[%s340 + $0x20] sm:$0xff] %v924
        %941 = vst [vmem:[%s340 + $0x28] sm:$0xff] %v925
        %942 = vst [vmem:[%s340 + $0x30] sm:$0xff] %v926
        %943 = vst [vmem:[%s340 + $0x38] sm:$0xff] %v927
        %944 = vst [vmem:[%s340 + $0x40] sm:$0xff] %v928
        %945 = vst [vmem:[%s340 + $0x48] sm:$0xff] %v929
        %946 = vst [vmem:[%s340 + $0x50] sm:$0xff] %v930
        %947 = vst [vmem:[%s340 + $0x58] sm:$0xff] %v931
        %948 = vst [vmem:[%s340 + $0x60] sm:$0xff] %v932
        %949 = vst [vmem:[%s340 + $0x68] sm:$0xff] %v933
        %950 = vst [vmem:[%s340 + $0x70] sm:$0xff] %v934
        %951 = vst [vmem:[%s340 + $0x78] sm:$0xff] %v935
        %s952 = sand.u32 %s186, 1
        %s953 = scalar_lea.sflag [#allocation4], %s952
        %s954 = sand.u32 %s186, 1
        %s955 = smul.addr %s954, 128
        %s956 = scalar_lea.vmem [#allocation10], %s955
        // Predicated region
        $region65: #{tpu_custom_call.1} parent=47 // pred_check
          %p957 = pneg %p196
        $region66: #{tpu_custom_call.1} parent=47 // pred_check_branch
          %959 = sbr.rel (%p957) target = $region68
        $region67: #{tpu_custom_call.1} parent=47 // pred_region
          %s960 = smul.u32 16, %s26
          %s962 = ssub.s32 2048, 2048
          %963 = vsyncadd %s953, %s962
          %s964 = smul.addr %s960, 128
          %s965 = scalar_lea.hbm %s7, %s964
          %s966 = sshll.u32 %s956, 4
          %s967 = int_to_ptr.vmem [resolvable:$true] %s966
          %972 = dma.vmem_to_hbm [thread:$0]  %s967, 2048, %s965, %s953, 128, 128, 8
        $region68: #{tpu_custom_call.1} parent=47 // pred_fallthru
          _
      $region48: #{tpu_custom_call.1} parent=5 // pred_fallthru
        _
      %p973 = scmp.le.s32.totalorder 2, %s21
      // Predicated region
      $region69: #{tpu_custom_call.1} parent=5 // pred_check
        %p974 = pneg %p973
      $region70: #{tpu_custom_call.1} parent=5 // pred_check_branch
        %976 = sbr.rel (%p974) target = $region72
      $region71: #{tpu_custom_call.1} parent=5 // pred_region
        %s977 = ssub.s32 %s21, 2
        // Predicated region
        $region73: #{tpu_custom_call.1} parent=71 // pred_check
          %p978 = pneg %p202
        $region74: #{tpu_custom_call.1} parent=71 // pred_check_branch
          %980 = sbr.rel (%p978) target = $region76
        $region75: #{tpu_custom_call.1} parent=71 // pred_region
          %s981 = sand.u32 %s187, 1
          %s982 = scalar_lea.sflag [#allocation4], %s981
          %s983 = sand.u32 %s187, 1
          %s984 = smul.addr %s983, 128
          %s985 = scalar_lea.vmem [#allocation10], %s984
          %986 = dma.done %s982, 2048
        $region76: #{tpu_custom_call.1} parent=71 // pred_fallthru
          _
      $region72: #{tpu_custom_call.1} parent=5 // pred_fallthru
        _
    $region6: #{tpu_custom_call.1} parent=1 // loop_footer
      %s25 = sadd.s32 1, %s21
    $region7: #{tpu_custom_call.1} parent=1 // loop_footer_branch
      %20 = sbr.rel target = $region3
    $region8: #{tpu_custom_call.1} parent=1 // loop_exit
      _
    %987 = vsyncpa [#allocation3], 1
    %s988 = scalar_lea.sflag [#allocation3], 1
    %989 = vsyncpa %s988, 1
    %990 = vsyncpa [#allocation6], 1
    %991 = vsyncpa [#allocation9], 1
    %992 = vsyncpa [#allocation4], 1
    %s993 = scalar_lea.sflag [#allocation4], 1
    %994 = vsyncpa %s993, 1

</llo_original>
